<compile_context>
chip_gen: v7x
topology: tpu7x:2x2x1
jax: 0.10.0
libtpu: 0.0.40
codegen_flags: <defaults>
</compile_context>

<pallas_src>
import jax
import jax.numpy as jnp
from jax.experimental import pallas as pl
from jax.experimental.pallas import tpu as pltpu

FEATURES_LENGTH = 128          # stands in for FEATURES_LENGTH[feature_type]
C1, C2, C3, C4, C5 = 1024, 512, 256, 64, 6
C4P = 128                      # fc1 output padded to lane width
C5P = 128                      # logits padded to lane width (lane-dense store)
BN_EPS = 1e-5
NEG_BIG = -1e30                # finite "minus infinity" for masked softmax
DEFAULT_TB = 1024              # batch tile; ~15-20 MB VMEM worst case


def _cnn_kernel(x_ref,
                w1_ref, b1_ref,
                w2_ref, b2_ref,
                w3_ref, b3_ref,
                w4_ref, b4_ref,
                w5_ref, b5_ref,
                o_ref):
    """Fused forward for one batch tile: 4x (bf16 matmul + folded-BN f32 bias
    + ReLU), fc2 matmul + bias, and an exactly-normalized masked softmax."""

    def block(h, w_ref, b_ref):
        # Native bf16xbf16 MXU matmul, f32 accumulation; bias/ReLU in f32.
        y = jnp.dot(h.astype(jnp.bfloat16), w_ref[...],
                    preferred_element_type=jnp.float32) + b_ref[...]
        return jnp.maximum(y, 0.0)                # ReLU (Dropout == identity)

    h = block(x_ref[...], w1_ref, b1_ref)         # conv1_1: F    -> 1024
    h = block(h, w2_ref, b2_ref)                  # conv1  : 1024 -> 512
    h = block(h, w3_ref, b3_ref)                  # conv2  : 512  -> 256
    h = block(h, w4_ref, b4_ref)                  # fc1    : 256  -> 128 (64 real)

    logits = jnp.dot(h.astype(jnp.bfloat16), w5_ref[...],
                     preferred_element_type=jnp.float32) + b5_ref[...]

    # Masked softmax over the 6 real classes; pad lanes forced to exactly 0 so
    # every row sums to 1 up to f32 rounding (no approximate reciprocal).
    lane = jax.lax.broadcasted_iota(jnp.int32, logits.shape, 1)
    mask = lane < C5
    logits = jnp.where(mask, logits, NEG_BIG)
    m = jnp.max(logits, axis=-1, keepdims=True)
    e = jnp.where(mask, jnp.exp(logits - m), 0.0)
    denom = jnp.sum(e, axis=-1, keepdims=True)
    o_ref[...] = e / denom


def _round_up(n, m):
    return ((n + m - 1) // m) * m


def _const_spec(shape):
    # Weights/biases: same block every grid step -> stay VMEM-resident.
    return pl.BlockSpec(shape, lambda i: (0,) * len(shape))


@jax.jit
def cnn_forward(x, params):
    """x: (B, FEATURES_LENGTH) float32.  Returns softmax probs (B, 6) float32."""
    B = x.shape[0]
    # Adaptive tile: minimal padding (<= 7 rows/tile) instead of round_up(B, TB).
    n_tiles = -(-B // DEFAULT_TB)                 # ceil(B / DEFAULT_TB)
    TB = _round_up(-(-B // n_tiles), 8)           # ceil(B / n_tiles), sublane-aligned
    Bp = _round_up(B, TB)
    if Bp != B:
        x = jnp.pad(x, ((0, Bp - B), (0, 0)))

    (w1, b1, w2, b2, w3, b3, w4, b4, w5, b5) = params
    in_specs = [
        pl.BlockSpec((TB, FEATURES_LENGTH), lambda i: (i, 0)),
        _const_spec(w1.shape), _const_spec(b1.shape),
        _const_spec(w2.shape), _const_spec(b2.shape),
        _const_spec(w3.shape), _const_spec(b3.shape),
        _const_spec(w4.shape), _const_spec(b4.shape),
        _const_spec(w5.shape), _const_spec(b5.shape),
    ]
    out = pl.pallas_call(
        _cnn_kernel,
        out_shape=jax.ShapeDtypeStruct((Bp, C5P), jnp.float32),
        grid=(Bp // TB,),
        in_specs=in_specs,
        out_specs=pl.BlockSpec((TB, C5P), lambda i: (i, 0)),
        compiler_params=pltpu.CompilerParams(
            dimension_semantics=("parallel",),     # megacore batch sharding on v7x
            vmem_limit_bytes=64 * 1024 * 1024),
    )(x, w1, b1, w2, b2, w3, b3, w4, b4, w5, b5)
    return out[:B, :C5]


def init_params(key):
    """Deterministic synthetic parameters with PyTorch-like statistics, already
    reduced to kernel form: Conv1d centre tap (Cin, Cout), eval-mode BatchNorm
    folded into weight columns + f32 bias, bf16 weights, lane-padded fc1/fc2."""
    dims = [(FEATURES_LENGTH, C1, 5), (C1, C2, 5), (C2, C3, 5), (C3, C4, 1)]
    keys = jax.random.split(key, 2 * len(dims) + 2)
    params = []
    ki = 0
    for cin, cout, k in dims:
        bound = 1.0 / jnp.sqrt(cin * float(k))
        w = jax.random.uniform(keys[ki], (cin, cout), jnp.float32, -bound, bound); ki += 1
        b = jax.random.uniform(keys[ki], (cout,), jnp.float32, -bound, bound); ki += 1
        gamma = jnp.ones((cout,), jnp.float32)
        beta = jnp.zeros((cout,), jnp.float32)
        mean = jnp.zeros((cout,), jnp.float32)
        var = jnp.ones((cout,), jnp.float32)
        scale = gamma / jnp.sqrt(var + BN_EPS)
        w_eff = w * scale[None, :]                       # fold BN scale into W
        b_eff = (b - mean) * scale + beta                # folded BN bias
        if cout == C4:                                   # pad fc1 out 64 -> 128
            w_eff = jnp.pad(w_eff, ((0, 0), (0, C4P - C4)))
            b_eff = jnp.pad(b_eff, (0, C4P - C4))
        params += [w_eff.astype(jnp.bfloat16),
                   b_eff.reshape(1, -1).astype(jnp.float32)]
    bound = 1.0 / jnp.sqrt(float(C4))
    w5 = jax.random.uniform(keys[ki], (C4, C5), jnp.float32, -bound, bound); ki += 1
    b5 = jax.random.uniform(keys[ki], (C5,), jnp.float32, -bound, bound); ki += 1
    w5 = jnp.pad(w5, ((0, C4P - C4), (0, C5P - C5)))     # zero pad rows/cols
    b5 = jnp.pad(b5, (0, C5P - C5))                      # pad lanes masked in-kernel
    params += [w5.astype(jnp.bfloat16),
               b5.reshape(1, C5P).astype(jnp.float32)]
    return tuple(params)


def _reference(x, params):
    """Pure-JAX reference performing the same bf16-activation / bf16-weight,
    f32-accumulate computation as the kernel."""
    (w1, b1, w2, b2, w3, b3, w4, b4, w5, b5) = params

    def blk(h, w, b):
        y = jnp.dot(h.astype(jnp.bfloat16), w,
                    preferred_element_type=jnp.float32) + b
        return jnp.maximum(y, 0.0)

    h = blk(x, w1, b1)
    h = blk(h, w2, b2)
    h = blk(h, w3, b3)
    h = blk(h, w4, b4)
    logits = jnp.dot(h.astype(jnp.bfloat16), w5,
                     preferred_element_type=jnp.float32) + b5
    return jax.nn.softmax(logits[:, :C5], axis=-1)


if __name__ == "__main__":
    key = jax.random.PRNGKey(0)
    kx, kx1, kp = jax.random.split(key, 3)
    B = 8
    x = jax.random.normal(kx, (B, FEATURES_LENGTH), jnp.float32)
    x1 = jax.random.normal(kx1, (B, FEATURES_LENGTH), jnp.float32)  # unused by forward (as in the module)
    params = init_params(kp)

    y = jax.block_until_ready(cnn_forward(x, params))
    y_ref = _reference(x, params)

    assert y.shape == (B, C5)
    assert bool(jnp.allclose(jnp.sum(y, axis=-1), 1.0, atol=1e-3))
    assert bool(jnp.allclose(y, y_ref, atol=2e-3, rtol=2e-3))
    print("KERNEL_OK")
</pallas_src>

<mosaic_0001>
module attributes {stable_mosaic.version = 11 : i64} {
  func.func @_cnn_kernel(%arg0: i32, %arg1: memref<8x128xf32, #tpu.memory_space<vmem>>, %arg2: memref<128x1024xbf16, #tpu.memory_space<vmem>>, %arg3: memref<1x1024xf32, #tpu.memory_space<vmem>>, %arg4: memref<1024x512xbf16, #tpu.memory_space<vmem>>, %arg5: memref<1x512xf32, #tpu.memory_space<vmem>>, %arg6: memref<512x256xbf16, #tpu.memory_space<vmem>>, %arg7: memref<1x256xf32, #tpu.memory_space<vmem>>, %arg8: memref<256x128xbf16, #tpu.memory_space<vmem>>, %arg9: memref<1x128xf32, #tpu.memory_space<vmem>>, %arg10: memref<128x128xbf16, #tpu.memory_space<vmem>>, %arg11: memref<1x128xf32, #tpu.memory_space<vmem>>, %arg12: memref<8x128xf32, #tpu.memory_space<vmem>>) attributes {dimension_semantics = [#tpu.dimension_semantics<parallel>], iteration_bounds = array<i64: 1>, scalar_prefetch = 0 : i64, scratch_operands = 0 : i64, tpu.core_type = #tpu.core_type<tc>, window_params = [{transform_indices = @transform_0, window_bounds = array<i64: 8, 128>}, {pipeline_mode = #tpu.pipeline_mode<synchronous>, transform_indices = @transform_1, window_bounds = array<i64: 128, 1024>}, {pipeline_mode = #tpu.pipeline_mode<synchronous>, transform_indices = @transform_2, window_bounds = array<i64: 1, 1024>}, {pipeline_mode = #tpu.pipeline_mode<synchronous>, transform_indices = @transform_3, window_bounds = array<i64: 1024, 512>}, {pipeline_mode = #tpu.pipeline_mode<synchronous>, transform_indices = @transform_4, window_bounds = array<i64: 1, 512>}, {pipeline_mode = #tpu.pipeline_mode<synchronous>, transform_indices = @transform_5, window_bounds = array<i64: 512, 256>}, {pipeline_mode = #tpu.pipeline_mode<synchronous>, transform_indices = @transform_6, window_bounds = array<i64: 1, 256>}, {pipeline_mode = #tpu.pipeline_mode<synchronous>, transform_indices = @transform_7, window_bounds = array<i64: 256, 128>}, {pipeline_mode = #tpu.pipeline_mode<synchronous>, transform_indices = @transform_8, window_bounds = array<i64: 1, 128>}, {pipeline_mode = #tpu.pipeline_mode<synchronous>, transform_indices = @transform_9, window_bounds = array<i64: 128, 128>}, {pipeline_mode = #tpu.pipeline_mode<synchronous>, transform_indices = @transform_10, window_bounds = array<i64: 1, 128>}, {transform_indices = @transform_11, window_bounds = array<i64: 8, 128>}]} {
    %c0 = arith.constant 0 : index
    %c0_0 = arith.constant 0 : index
    %0 = vector.load %arg1[%c0, %c0_0] : memref<8x128xf32, #tpu.memory_space<vmem>>, vector<8x128xf32>
    %1 = arith.truncf %0 : vector<8x128xf32> to vector<8x128xbf16>
    %c0_1 = arith.constant 0 : index
    %c0_2 = arith.constant 0 : index
    %2 = vector.load %arg2[%c0_1, %c0_2] : memref<128x1024xbf16, #tpu.memory_space<vmem>>, vector<128x1024xbf16>
    %cst = arith.constant dense<0.000000e+00> : vector<8x1024xf32>
    %3 = tpu.matmul %1, %2, %cst {dimension_numbers = #tpu.dot_dimension_numbers<[1], [0], [0], [1], [0, 0, 1, 1], [], []>} : vector<8x128xbf16>, vector<128x1024xbf16>, vector<8x1024xf32> -> vector<8x1024xf32>
    %c0_3 = arith.constant 0 : index
    %c0_4 = arith.constant 0 : index
    %4 = vector.load %arg3[%c0_3, %c0_4] : memref<1x1024xf32, #tpu.memory_space<vmem>>, vector<1x1024xf32>
    %5 = vector.broadcast %4 : vector<1x1024xf32> to vector<8x1024xf32>
    %6 = arith.addf %3, %5 : vector<8x1024xf32>
    %cst_5 = arith.constant 0.000000e+00 : f32
    %7 = vector.broadcast %cst_5 : f32 to vector<8x1024xf32>
    %8 = arith.maximumf %6, %7 : vector<8x1024xf32>
    %9 = arith.truncf %8 : vector<8x1024xf32> to vector<8x1024xbf16>
    %c0_6 = arith.constant 0 : index
    %c0_7 = arith.constant 0 : index
    %10 = vector.load %arg4[%c0_6, %c0_7] : memref<1024x512xbf16, #tpu.memory_space<vmem>>, vector<1024x512xbf16>
    %cst_8 = arith.constant dense<0.000000e+00> : vector<8x512xf32>
    %11 = tpu.matmul %9, %10, %cst_8 {dimension_numbers = #tpu.dot_dimension_numbers<[1], [0], [0], [1], [0, 0, 1, 1], [], []>} : vector<8x1024xbf16>, vector<1024x512xbf16>, vector<8x512xf32> -> vector<8x512xf32>
    %c0_9 = arith.constant 0 : index
    %c0_10 = arith.constant 0 : index
    %12 = vector.load %arg5[%c0_9, %c0_10] : memref<1x512xf32, #tpu.memory_space<vmem>>, vector<1x512xf32>
    %13 = vector.broadcast %12 : vector<1x512xf32> to vector<8x512xf32>
    %14 = arith.addf %11, %13 : vector<8x512xf32>
    %cst_11 = arith.constant 0.000000e+00 : f32
    %15 = vector.broadcast %cst_11 : f32 to vector<8x512xf32>
    %16 = arith.maximumf %14, %15 : vector<8x512xf32>
    %17 = arith.truncf %16 : vector<8x512xf32> to vector<8x512xbf16>
    %c0_12 = arith.constant 0 : index
    %c0_13 = arith.constant 0 : index
    %18 = vector.load %arg6[%c0_12, %c0_13] : memref<512x256xbf16, #tpu.memory_space<vmem>>, vector<512x256xbf16>
    %cst_14 = arith.constant dense<0.000000e+00> : vector<8x256xf32>
    %19 = tpu.matmul %17, %18, %cst_14 {dimension_numbers = #tpu.dot_dimension_numbers<[1], [0], [0], [1], [0, 0, 1, 1], [], []>} : vector<8x512xbf16>, vector<512x256xbf16>, vector<8x256xf32> -> vector<8x256xf32>
    %c0_15 = arith.constant 0 : index
    %c0_16 = arith.constant 0 : index
    %20 = vector.load %arg7[%c0_15, %c0_16] : memref<1x256xf32, #tpu.memory_space<vmem>>, vector<1x256xf32>
    %21 = vector.broadcast %20 : vector<1x256xf32> to vector<8x256xf32>
    %22 = arith.addf %19, %21 : vector<8x256xf32>
    %cst_17 = arith.constant 0.000000e+00 : f32
    %23 = vector.broadcast %cst_17 : f32 to vector<8x256xf32>
    %24 = arith.maximumf %22, %23 : vector<8x256xf32>
    %25 = arith.truncf %24 : vector<8x256xf32> to vector<8x256xbf16>
    %c0_18 = arith.constant 0 : index
    %c0_19 = arith.constant 0 : index
    %26 = vector.load %arg8[%c0_18, %c0_19] : memref<256x128xbf16, #tpu.memory_space<vmem>>, vector<256x128xbf16>
    %cst_20 = arith.constant dense<0.000000e+00> : vector<8x128xf32>
    %27 = tpu.matmul %25, %26, %cst_20 {dimension_numbers = #tpu.dot_dimension_numbers<[1], [0], [0], [1], [0, 0, 1, 1], [], []>} : vector<8x256xbf16>, vector<256x128xbf16>, vector<8x128xf32> -> vector<8x128xf32>
    %c0_21 = arith.constant 0 : index
    %c0_22 = arith.constant 0 : index
    %28 = vector.load %arg9[%c0_21, %c0_22] : memref<1x128xf32, #tpu.memory_space<vmem>>, vector<1x128xf32>
    %29 = vector.broadcast %28 : vector<1x128xf32> to vector<8x128xf32>
    %30 = arith.addf %27, %29 : vector<8x128xf32>
    %cst_23 = arith.constant 0.000000e+00 : f32
    %31 = vector.broadcast %cst_23 : f32 to vector<8x128xf32>
    %32 = arith.maximumf %30, %31 : vector<8x128xf32>
    %33 = arith.truncf %32 : vector<8x128xf32> to vector<8x128xbf16>
    %c0_24 = arith.constant 0 : index
    %c0_25 = arith.constant 0 : index
    %34 = vector.load %arg10[%c0_24, %c0_25] : memref<128x128xbf16, #tpu.memory_space<vmem>>, vector<128x128xbf16>
    %cst_26 = arith.constant dense<0.000000e+00> : vector<8x128xf32>
    %35 = tpu.matmul %33, %34, %cst_26 {dimension_numbers = #tpu.dot_dimension_numbers<[1], [0], [0], [1], [0, 0, 1, 1], [], []>} : vector<8x128xbf16>, vector<128x128xbf16>, vector<8x128xf32> -> vector<8x128xf32>
    %c0_27 = arith.constant 0 : index
    %c0_28 = arith.constant 0 : index
    %36 = vector.load %arg11[%c0_27, %c0_28] : memref<1x128xf32, #tpu.memory_space<vmem>>, vector<1x128xf32>
    %37 = vector.broadcast %36 : vector<1x128xf32> to vector<8x128xf32>
    %38 = arith.addf %35, %37 : vector<8x128xf32>
    %39 = tpu.iota {dimensions = array<i32: 1>} : vector<8x128xi32>
    %c6_i32 = arith.constant 6 : i32
    %40 = vector.broadcast %c6_i32 : i32 to vector<8x128xi32>
    %41 = arith.cmpi slt, %39, %40 : vector<8x128xi32>
    %cst_29 = arith.constant -1.000000e+30 : f32
    %42 = vector.broadcast %cst_29 : f32 to vector<8x128xf32>
    %43 = arith.select %41, %38, %42 : vector<8x128xi1>, vector<8x128xf32>
    %cst_30 = arith.constant dense<0xFF800000> : vector<8xf32>
    %44 = vector.multi_reduction <maximumf>, %43, %cst_30 [1] : vector<8x128xf32> to vector<8xf32>
    %45 = vector.shape_cast %44 : vector<8xf32> to vector<8x1xf32>
    %46 = vector.broadcast %45 : vector<8x1xf32> to vector<8x128xf32>
    %47 = arith.subf %43, %46 : vector<8x128xf32>
    %48 = math.exp %47 : vector<8x128xf32>
    %cst_31 = arith.constant 0.000000e+00 : f32
    %49 = vector.broadcast %cst_31 : f32 to vector<8x128xf32>
    %50 = arith.select %41, %48, %49 : vector<8x128xi1>, vector<8x128xf32>
    %cst_32 = arith.constant dense<0.000000e+00> : vector<8xf32>
    %51 = vector.multi_reduction <add>, %50, %cst_32 [1] : vector<8x128xf32> to vector<8xf32>
    %52 = vector.shape_cast %51 : vector<8xf32> to vector<8x1xf32>
    %53 = vector.broadcast %52 : vector<8x1xf32> to vector<8x128xf32>
    %54 = arith.divf %50, %53 : vector<8x128xf32>
    %c0_33 = arith.constant 0 : index
    %c0_34 = arith.constant 0 : index
    %55 = vector.load %arg12[%c0_33, %c0_34] : memref<8x128xf32, #tpu.memory_space<vmem>>, vector<8x128xf32>
    tpu.vector_store %arg12[%c0_33, %c0_34], %54 {strides = array<i32>} : memref<8x128xf32, #tpu.memory_space<vmem>>, vector<8x128xf32>,
    return
  }
  func.func @transform_0(%arg0: i32) -> (i32, i32) {
    %c0_i32 = arith.constant 0 : i32
    %c0_i32_0 = arith.constant 0 : i32
    return %arg0, %c0_i32 : i32, i32
  }
  func.func @transform_1(%arg0: i32) -> (i32, i32) {
    %c0_i32 = arith.constant 0 : i32
    %c0_i32_0 = arith.constant 0 : i32
    %c0_i32_1 = arith.constant 0 : i32
    return %c0_i32, %c0_i32_0 : i32, i32
  }
  func.func @transform_2(%arg0: i32) -> (i32, i32) {
    %c0_i32 = arith.constant 0 : i32
    %c0_i32_0 = arith.constant 0 : i32
    %c0_i32_1 = arith.constant 0 : i32
    return %c0_i32, %c0_i32_0 : i32, i32
  }
  func.func @transform_3(%arg0: i32) -> (i32, i32) {
    %c0_i32 = arith.constant 0 : i32
    %c0_i32_0 = arith.constant 0 : i32
    %c0_i32_1 = arith.constant 0 : i32
    return %c0_i32, %c0_i32_0 : i32, i32
  }
  func.func @transform_4(%arg0: i32) -> (i32, i32) {
    %c0_i32 = arith.constant 0 : i32
    %c0_i32_0 = arith.constant 0 : i32
    %c0_i32_1 = arith.constant 0 : i32
    return %c0_i32, %c0_i32_0 : i32, i32
  }
  func.func @transform_5(%arg0: i32) -> (i32, i32) {
    %c0_i32 = arith.constant 0 : i32
    %c0_i32_0 = arith.constant 0 : i32
    %c0_i32_1 = arith.constant 0 : i32
    return %c0_i32, %c0_i32_0 : i32, i32
  }
  func.func @transform_6(%arg0: i32) -> (i32, i32) {
    %c0_i32 = arith.constant 0 : i32
    %c0_i32_0 = arith.constant 0 : i32
    %c0_i32_1 = arith.constant 0 : i32
    return %c0_i32, %c0_i32_0 : i32, i32
  }
  func.func @transform_7(%arg0: i32) -> (i32, i32) {
    %c0_i32 = arith.constant 0 : i32
    %c0_i32_0 = arith.constant 0 : i32
    %c0_i32_1 = arith.constant 0 : i32
    return %c0_i32, %c0_i32_0 : i32, i32
  }
  func.func @transform_8(%arg0: i32) -> (i32, i32) {
    %c0_i32 = arith.constant 0 : i32
    %c0_i32_0 = arith.constant 0 : i32
    %c0_i32_1 = arith.constant 0 : i32
    return %c0_i32, %c0_i32_0 : i32, i32
  }
  func.func @transform_9(%arg0: i32) -> (i32, i32) {
    %c0_i32 = arith.constant 0 : i32
    %c0_i32_0 = arith.constant 0 : i32
    %c0_i32_1 = arith.constant 0 : i32
    return %c0_i32, %c0_i32_0 : i32, i32
  }
  func.func @transform_10(%arg0: i32) -> (i32, i32) {
    %c0_i32 = arith.constant 0 : i32
    %c0_i32_0 = arith.constant 0 : i32
    %c0_i32_1 = arith.constant 0 : i32
    return %c0_i32, %c0_i32_0 : i32, i32
  }
  func.func @transform_11(%arg0: i32) -> (i32, i32) {
    %c0_i32 = arith.constant 0 : i32
    %c0_i32_0 = arith.constant 0 : i32
    return %arg0, %c0_i32 : i32, i32
  }
}

</mosaic_0001>

<llo_original>
// kernel: cnn_forward.1
$region0: #{cnn_forward.1}
  #allocation0 [shape = 'u32[]', space=smem, size = 0x4, offset = 0x4, fixed_abs, tag = 'smem constant byte address 0x4 - core index']
  #allocation1 [shape = 'u32[144,128]{1,0:T(1,128)}', space=vmem, size = 0x12000, scoped, tag = 'internal scratch']
  %s0 = inlined_call_operand.hbm [shape: f32[8,128], index: 0, kind: input, shape index: {}]
  %s1 = inlined_call_operand.hbm [shape: bf16[128,1024], index: 1, kind: input, shape index: {}]
  %s2 = inlined_call_operand.hbm [shape: f32[1,1024], index: 2, kind: input, shape index: {}]
  %s3 = inlined_call_operand.hbm [shape: bf16[1024,512], index: 3, kind: input, shape index: {}]
  %s4 = inlined_call_operand.hbm [shape: f32[1,512], index: 4, kind: input, shape index: {}]
  %s5 = inlined_call_operand.hbm [shape: bf16[512,256], index: 5, kind: input, shape index: {}]
  %s6 = inlined_call_operand.hbm [shape: f32[1,256], index: 6, kind: input, shape index: {}]
  %s7 = inlined_call_operand.hbm [shape: bf16[256,128], index: 7, kind: input, shape index: {}]
  %s8 = inlined_call_operand.hbm [shape: f32[1,128], index: 8, kind: input, shape index: {}]
  %s9 = inlined_call_operand.hbm [shape: bf16[128,128], index: 9, kind: input, shape index: {}]
  %s10 = inlined_call_operand.hbm [shape: f32[1,128], index: 10, kind: input, shape index: {}]
  %s11 = inlined_call_operand.hbm [shape: f32[8,128], index: 11, kind: output, shape index: {}]
  %s12 = sld [smem:[#allocation0]]
  $region98: #{cnn_forward.1} parent=0
    _
  %s14 = ssub.s32 1, %s12
  %s15 = scalar_select 0, %s14, %s12
  $region1: #{cnn_forward.1} parent=0
    #allocation2 [shape = 'u8[4096]{0}', space=vmem, size = 0x1000, scoped, tag = 'input window, operand 0, single buffered']
    #allocation3 [shape = 's32[1]{0}', space=sflag, size = 0x4, scoped, tag = 'scoped memory for cnn_forward.1']
    #allocation4 [shape = 's32[1]{0}', space=sflag, size = 0x4, scoped, tag = 'scoped memory for cnn_forward.1']
    #allocation5 [shape = 'u8[262144]{0}', space=vmem, size = 0x40000, scoped, tag = 'input window, operand 1, single buffered']
    #allocation6 [shape = 's32[1]{0}', space=sflag, size = 0x4, scoped, tag = 'scoped memory for cnn_forward.1']
    #allocation7 [shape = 'u8[4096]{0}', space=vmem, size = 0x1000, scoped, tag = 'input window, operand 2, single buffered']
    #allocation8 [shape = 'u8[1048576]{0}', space=vmem, size = 0x100000, scoped, tag = 'input window, operand 3, single buffered']
    #allocation9 [shape = 's32[1]{0}', space=sflag, size = 0x4, scoped, tag = 'scoped memory for cnn_forward.1']
    #allocation10 [shape = 'u8[2048]{0}', space=vmem, size = 0x800, scoped, tag = 'input window, operand 4, single buffered']
    #allocation11 [shape = 'u8[262144]{0}', space=vmem, size = 0x40000, scoped, tag = 'input window, operand 5, single buffered']
    #allocation12 [shape = 's32[1]{0}', space=sflag, size = 0x4, scoped, tag = 'scoped memory for cnn_forward.1']
    #allocation13 [shape = 'u8[1024]{0}', space=vmem, size = 0x400, scoped, tag = 'input window, operand 6, single buffered']
    #allocation14 [shape = 'u8[65536]{0}', space=vmem, size = 0x10000, scoped, tag = 'input window, operand 7, single buffered']
    #allocation15 [shape = 's32[1]{0}', space=sflag, size = 0x4, scoped, tag = 'scoped memory for cnn_forward.1']
    #allocation16 [shape = 'u8[512]{0}', space=vmem, size = 0x400, scoped, tag = 'input window, operand 8, single buffered']
    #allocation17 [shape = 'u8[32768]{0}', space=vmem, size = 0x8000, scoped, tag = 'input window, operand 9, single buffered']
    #allocation18 [shape = 's32[1]{0}', space=sflag, size = 0x4, scoped, tag = 'scoped memory for cnn_forward.1']
    #allocation19 [shape = 'u8[512]{0}', space=vmem, size = 0x400, scoped, tag = 'input window, operand 10, single buffered']
    #allocation20 [shape = 'u8[4096]{0}', space=vmem, size = 0x1000, scoped, tag = 'output window, operand 0, single buffered']
    %16 = vsyncpa [#allocation3], 0
    %17 = vsyncpa [#allocation6], 0
    %18 = vsyncpa [#allocation9], 0
    %19 = vsyncpa [#allocation12], 0
    %20 = vsyncpa [#allocation15], 0
    %21 = vsyncpa [#allocation18], 0
    %22 = vsyncpa [#allocation4], 0
    // Predicated region
    $region2: #{cnn_forward.1} parent=1 // pred_check
      _
    $region3: #{cnn_forward.1} parent=1 // pred_check_branch
      %24 = sbr.rel (0) target = $region5
    $region4: #{cnn_forward.1} parent=1 // pred_region
      %s26 = ssub.s32 128, 128
      %27 = vsyncadd [#allocation3], %s26
      %s29 = sshll.u32 [#allocation2], 4
      %s30 = int_to_ptr.vmem [resolvable:$true] %s29
      %32 = dma.hbm_to_vmem [thread:$0]  %s0, 128, %s30, [#allocation3]
    $region5: #{cnn_forward.1} parent=1 // pred_fallthru
      _
    // Predicated region
    $region6: #{cnn_forward.1} parent=1 // pred_check
      _
    $region7: #{cnn_forward.1} parent=1 // pred_check_branch
      %34 = sbr.rel (0) target = $region9
    $region8: #{cnn_forward.1} parent=1 // pred_region
      %s36 = ssub.s32 8192, 8192
      %37 = vsyncadd [#allocation6], %s36
      %s38 = sshll.u32 [#allocation5], 4
      %s39 = int_to_ptr.vmem [resolvable:$true] %s38
      %44 = dma.hbm_to_vmem [thread:$0]  %s1, 8192, %s39, [#allocation6], 512, 512, 32
    $region9: #{cnn_forward.1} parent=1 // pred_fallthru
      _
    // Predicated region
    $region10: #{cnn_forward.1} parent=1 // pred_check
      _
    $region11: #{cnn_forward.1} parent=1 // pred_check_branch
      %46 = sbr.rel (0) target = $region13
    $region12: #{cnn_forward.1} parent=1 // pred_region
      %s48 = ssub.s32 128, 128
      %49 = vsyncadd [#allocation6], %s48
      %s51 = sshll.u32 [#allocation7], 4
      %s52 = int_to_ptr.vmem [resolvable:$true] %s51
      %54 = dma.hbm_to_vmem [thread:$0]  %s2, 128, %s52, [#allocation6]
    $region13: #{cnn_forward.1} parent=1 // pred_fallthru
      _
    // Predicated region
    $region14: #{cnn_forward.1} parent=1 // pred_check
      _
    $region15: #{cnn_forward.1} parent=1 // pred_check_branch
      %56 = sbr.rel (0) target = $region17
    $region16: #{cnn_forward.1} parent=1 // pred_region
      %s58 = ssub.s32 32768, 32768
      %59 = vsyncadd [#allocation9], %s58
      %s60 = sshll.u32 [#allocation8], 4
      %s61 = int_to_ptr.vmem [resolvable:$true] %s60
      %66 = dma.hbm_to_vmem [thread:$0]  %s3, 32768, %s61, [#allocation9], 256, 256, 16
    $region17: #{cnn_forward.1} parent=1 // pred_fallthru
      _
    // Predicated region
    $region18: #{cnn_forward.1} parent=1 // pred_check
      _
    $region19: #{cnn_forward.1} parent=1 // pred_check_branch
      %68 = sbr.rel (0) target = $region21
    $region20: #{cnn_forward.1} parent=1 // pred_region
      %s70 = ssub.s32 64, 64
      %71 = vsyncadd [#allocation9], %s70
      %s73 = sshll.u32 [#allocation10], 4
      %s74 = int_to_ptr.vmem [resolvable:$true] %s73
      %76 = dma.hbm_to_vmem [thread:$0]  %s4, 64, %s74, [#allocation9]
    $region21: #{cnn_forward.1} parent=1 // pred_fallthru
      _
    // Predicated region
    $region22: #{cnn_forward.1} parent=1 // pred_check
      _
    $region23: #{cnn_forward.1} parent=1 // pred_check_branch
      %78 = sbr.rel (0) target = $region25
    $region24: #{cnn_forward.1} parent=1 // pred_region
      %s80 = ssub.s32 8192, 8192
      %81 = vsyncadd [#allocation12], %s80
      %s82 = sshll.u32 [#allocation11], 4
      %s83 = int_to_ptr.vmem [resolvable:$true] %s82
      %88 = dma.hbm_to_vmem [thread:$0]  %s5, 8192, %s83, [#allocation12], 128, 128, 8
    $region25: #{cnn_forward.1} parent=1 // pred_fallthru
      _
    // Predicated region
    $region26: #{cnn_forward.1} parent=1 // pred_check
      _
    $region27: #{cnn_forward.1} parent=1 // pred_check_branch
      %90 = sbr.rel (0) target = $region29
    $region28: #{cnn_forward.1} parent=1 // pred_region
      %s92 = ssub.s32 32, 32
      %93 = vsyncadd [#allocation12], %s92
      %s95 = sshll.u32 [#allocation13], 4
      %s96 = int_to_ptr.vmem [resolvable:$true] %s95
      %98 = dma.hbm_to_vmem [thread:$0]  %s6, 32, %s96, [#allocation12]
    $region29: #{cnn_forward.1} parent=1 // pred_fallthru
      _
    // Predicated region
    $region30: #{cnn_forward.1} parent=1 // pred_check
      _
    $region31: #{cnn_forward.1} parent=1 // pred_check_branch
      %100 = sbr.rel (0) target = $region33
    $region32: #{cnn_forward.1} parent=1 // pred_region
      %s102 = ssub.s32 2048, 2048
      %103 = vsyncadd [#allocation15], %s102
      %s104 = sshll.u32 [#allocation14], 4
      %s105 = int_to_ptr.vmem [resolvable:$true] %s104
      %110 = dma.hbm_to_vmem [thread:$0]  %s7, 2048, %s105, [#allocation15], 64, 64, 4
    $region33: #{cnn_forward.1} parent=1 // pred_fallthru
      _
    // Predicated region
    $region34: #{cnn_forward.1} parent=1 // pred_check
      _
    $region35: #{cnn_forward.1} parent=1 // pred_check_branch
      %112 = sbr.rel (0) target = $region37
    $region36: #{cnn_forward.1} parent=1 // pred_region
      %s114 = ssub.s32 16, 16
      %115 = vsyncadd [#allocation15], %s114
      %s117 = sshll.u32 [#allocation16], 4
      %s118 = int_to_ptr.vmem [resolvable:$true] %s117
      %120 = dma.hbm_to_vmem [thread:$0]  %s8, 16, %s118, [#allocation15]
    $region37: #{cnn_forward.1} parent=1 // pred_fallthru
      _
    // Predicated region
    $region38: #{cnn_forward.1} parent=1 // pred_check
      _
    $region39: #{cnn_forward.1} parent=1 // pred_check_branch
      %122 = sbr.rel (0) target = $region41
    $region40: #{cnn_forward.1} parent=1 // pred_region
      %s124 = ssub.s32 1024, 1024
      %125 = vsyncadd [#allocation18], %s124
      %s126 = sshll.u32 [#allocation17], 4
      %s127 = int_to_ptr.vmem [resolvable:$true] %s126
      %132 = dma.hbm_to_vmem [thread:$0]  %s9, 1024, %s127, [#allocation18], 64, 64, 4
    $region41: #{cnn_forward.1} parent=1 // pred_fallthru
      _
    // Predicated region
    $region42: #{cnn_forward.1} parent=1 // pred_check
      _
    $region43: #{cnn_forward.1} parent=1 // pred_check_branch
      %134 = sbr.rel (0) target = $region45
    $region44: #{cnn_forward.1} parent=1 // pred_region
      %s136 = ssub.s32 16, 16
      %137 = vsyncadd [#allocation18], %s136
      %s139 = sshll.u32 [#allocation19], 4
      %s140 = int_to_ptr.vmem [resolvable:$true] %s139
      %142 = dma.hbm_to_vmem [thread:$0]  %s10, 16, %s140, [#allocation18]
    $region45: #{cnn_forward.1} parent=1 // pred_fallthru
      _
    // Predicated region
    $region46: #{cnn_forward.1} parent=1 // pred_check
      _
    $region47: #{cnn_forward.1} parent=1 // pred_check_branch
      %144 = sbr.rel (0) target = $region49
    $region48: #{cnn_forward.1} parent=1 // pred_region
      %145 = dma.done [#allocation3], 128
    $region49: #{cnn_forward.1} parent=1 // pred_fallthru
      _
    // Predicated region
    $region50: #{cnn_forward.1} parent=1 // pred_check
      _
    $region51: #{cnn_forward.1} parent=1 // pred_check_branch
      %147 = sbr.rel (0) target = $region53
    $region52: #{cnn_forward.1} parent=1 // pred_region
      %148 = dma.done [#allocation6], 8192
    $region53: #{cnn_forward.1} parent=1 // pred_fallthru
      _
    // Predicated region
    $region54: #{cnn_forward.1} parent=1 // pred_check
      _
    $region55: #{cnn_forward.1} parent=1 // pred_check_branch
      %150 = sbr.rel (0) target = $region57
    $region56: #{cnn_forward.1} parent=1 // pred_region
      %151 = dma.done [#allocation6], 128
    $region57: #{cnn_forward.1} parent=1 // pred_fallthru
      _
    // Predicated region
    $region58: #{cnn_forward.1} parent=1 // pred_check
      _
    $region59: #{cnn_forward.1} parent=1 // pred_check_branch
      %153 = sbr.rel (0) target = $region61
    $region60: #{cnn_forward.1} parent=1 // pred_region
      %154 = dma.done [#allocation9], 32768
    $region61: #{cnn_forward.1} parent=1 // pred_fallthru
      _
    // Predicated region
    $region62: #{cnn_forward.1} parent=1 // pred_check
      _
    $region63: #{cnn_forward.1} parent=1 // pred_check_branch
      %156 = sbr.rel (0) target = $region65
    $region64: #{cnn_forward.1} parent=1 // pred_region
      %157 = dma.done [#allocation9], 64
    $region65: #{cnn_forward.1} parent=1 // pred_fallthru
      _
    // Predicated region
    $region66: #{cnn_forward.1} parent=1 // pred_check
      _
    $region67: #{cnn_forward.1} parent=1 // pred_check_branch
      %159 = sbr.rel (0) target = $region69
    $region68: #{cnn_forward.1} parent=1 // pred_region
      %160 = dma.done [#allocation12], 8192
    $region69: #{cnn_forward.1} parent=1 // pred_fallthru
      _
    // Predicated region
    $region70: #{cnn_forward.1} parent=1 // pred_check
      _
    $region71: #{cnn_forward.1} parent=1 // pred_check_branch
      %162 = sbr.rel (0) target = $region73
    $region72: #{cnn_forward.1} parent=1 // pred_region
      %163 = dma.done [#allocation12], 32
    $region73: #{cnn_forward.1} parent=1 // pred_fallthru
      _
    // Predicated region
    $region74: #{cnn_forward.1} parent=1 // pred_check
      _
    $region75: #{cnn_forward.1} parent=1 // pred_check_branch
      %165 = sbr.rel (0) target = $region77
    $region76: #{cnn_forward.1} parent=1 // pred_region
      %166 = dma.done [#allocation15], 2048
    $region77: #{cnn_forward.1} parent=1 // pred_fallthru
      _
    // Predicated region
    $region78: #{cnn_forward.1} parent=1 // pred_check
      _
    $region79: #{cnn_forward.1} parent=1 // pred_check_branch
      %168 = sbr.rel (0) target = $region81
    $region80: #{cnn_forward.1} parent=1 // pred_region
      %169 = dma.done [#allocation15], 16
    $region81: #{cnn_forward.1} parent=1 // pred_fallthru
      _
    // Predicated region
    $region82: #{cnn_forward.1} parent=1 // pred_check
      _
    $region83: #{cnn_forward.1} parent=1 // pred_check_branch
      %171 = sbr.rel (0) target = $region85
    $region84: #{cnn_forward.1} parent=1 // pred_region
      %172 = dma.done [#allocation18], 1024
    $region85: #{cnn_forward.1} parent=1 // pred_fallthru
      _
    // Predicated region
    $region86: #{cnn_forward.1} parent=1 // pred_check
      _
    $region87: #{cnn_forward.1} parent=1 // pred_check_branch
      %174 = sbr.rel (0) target = $region89
    $region88: #{cnn_forward.1} parent=1 // pred_region
      %175 = dma.done [#allocation18], 16
    $region89: #{cnn_forward.1} parent=1 // pred_fallthru
      _
    %v177 = vld [vmem:[#allocation2] sm:$0xff]
    %v178 = vpack.c.bf16 %v177, %v177
    %v179 = vld [vmem:[#allocation5] sm:$0xff]
    %v180 = vld [vmem:[#allocation5 + $0x8] sm:$0xff]
    %v181 = vld [vmem:[#allocation5 + $0x10] sm:$0xff]
    %v182 = vld [vmem:[#allocation5 + $0x18] sm:$0xff]
    %v183 = vld [vmem:[#allocation5 + $0x20] sm:$0xff]
    %v184 = vld [vmem:[#allocation5 + $0x28] sm:$0xff]
    %v185 = vld [vmem:[#allocation5 + $0x30] sm:$0xff]
    %v186 = vld [vmem:[#allocation5 + $0x38] sm:$0xff]
    %v187 = vld [vmem:[#allocation5 + $0x40] sm:$0xff]
    %v188 = vld [vmem:[#allocation5 + $0x48] sm:$0xff]
    %v189 = vld [vmem:[#allocation5 + $0x50] sm:$0xff]
    %v190 = vld [vmem:[#allocation5 + $0x58] sm:$0xff]
    %v191 = vld [vmem:[#allocation5 + $0x60] sm:$0xff]
    %v192 = vld [vmem:[#allocation5 + $0x68] sm:$0xff]
    %v193 = vld [vmem:[#allocation5 + $0x70] sm:$0xff]
    %v194 = vld [vmem:[#allocation5 + $0x78] sm:$0xff]
    %v195 = vld [vmem:[#allocation5 + $0x80] sm:$0xff]
    %v196 = vld [vmem:[#allocation5 + $0x88] sm:$0xff]
    %v197 = vld [vmem:[#allocation5 + $0x90] sm:$0xff]
    %v198 = vld [vmem:[#allocation5 + $0x98] sm:$0xff]
    %v199 = vld [vmem:[#allocation5 + $0xa0] sm:$0xff]
    %v200 = vld [vmem:[#allocation5 + $0xa8] sm:$0xff]
    %v201 = vld [vmem:[#allocation5 + $0xb0] sm:$0xff]
    %v202 = vld [vmem:[#allocation5 + $0xb8] sm:$0xff]
    %v203 = vld [vmem:[#allocation5 + $0xc0] sm:$0xff]
    %v204 = vld [vmem:[#allocation5 + $0xc8] sm:$0xff]
    %v205 = vld [vmem:[#allocation5 + $0xd0] sm:$0xff]
    %v206 = vld [vmem:[#allocation5 + $0xd8] sm:$0xff]
    %v207 = vld [vmem:[#allocation5 + $0xe0] sm:$0xff]
    %v208 = vld [vmem:[#allocation5 + $0xe8] sm:$0xff]
    %v209 = vld [vmem:[#allocation5 + $0xf0] sm:$0xff]
    %v210 = vld [vmem:[#allocation5 + $0xf8] sm:$0xff]
    %v211 = vld [vmem:[#allocation5 + $0x100] sm:$0xff]
    %v212 = vld [vmem:[#allocation5 + $0x108] sm:$0xff]
    %v213 = vld [vmem:[#allocation5 + $0x110] sm:$0xff]
    %v214 = vld [vmem:[#allocation5 + $0x118] sm:$0xff]
    %v215 = vld [vmem:[#allocation5 + $0x120] sm:$0xff]
    %v216 = vld [vmem:[#allocation5 + $0x128] sm:$0xff]
    %v217 = vld [vmem:[#allocation5 + $0x130] sm:$0xff]
    %v218 = vld [vmem:[#allocation5 + $0x138] sm:$0xff]
    %v219 = vld [vmem:[#allocation5 + $0x140] sm:$0xff]
    %v220 = vld [vmem:[#allocation5 + $0x148] sm:$0xff]
    %v221 = vld [vmem:[#allocation5 + $0x150] sm:$0xff]
    %v222 = vld [vmem:[#allocation5 + $0x158] sm:$0xff]
    %v223 = vld [vmem:[#allocation5 + $0x160] sm:$0xff]
    %v224 = vld [vmem:[#allocation5 + $0x168] sm:$0xff]
    %v225 = vld [vmem:[#allocation5 + $0x170] sm:$0xff]
    %v226 = vld [vmem:[#allocation5 + $0x178] sm:$0xff]
    %v227 = vld [vmem:[#allocation5 + $0x180] sm:$0xff]
    %v228 = vld [vmem:[#allocation5 + $0x188] sm:$0xff]
    %v229 = vld [vmem:[#allocation5 + $0x190] sm:$0xff]
    %v230 = vld [vmem:[#allocation5 + $0x198] sm:$0xff]
    %v231 = vld [vmem:[#allocation5 + $0x1a0] sm:$0xff]
    %v232 = vld [vmem:[#allocation5 + $0x1a8] sm:$0xff]
    %v233 = vld [vmem:[#allocation5 + $0x1b0] sm:$0xff]
    %v234 = vld [vmem:[#allocation5 + $0x1b8] sm:$0xff]
    %v235 = vld [vmem:[#allocation5 + $0x1c0] sm:$0xff]
    %v236 = vld [vmem:[#allocation5 + $0x1c8] sm:$0xff]
    %v237 = vld [vmem:[#allocation5 + $0x1d0] sm:$0xff]
    %v238 = vld [vmem:[#allocation5 + $0x1d8] sm:$0xff]
    %v239 = vld [vmem:[#allocation5 + $0x1e0] sm:$0xff]
    %v240 = vld [vmem:[#allocation5 + $0x1e8] sm:$0xff]
    %v241 = vld [vmem:[#allocation5 + $0x1f0] sm:$0xff]
    %v242 = vld [vmem:[#allocation5 + $0x1f8] sm:$0xff]
    %v243 = vld [vmem:[#allocation7] sm:$0xff]
    %v245 = vlaneseq
    %v246 = vshrl.u32 %v245, 7
    %v247 = vsub.s32 0, %v246
    %v248 = vrot.slane %v243, %v247
    %v249 = vlaneseq
    %v250 = vshrl.u32 %v249, 7
    %v251 = vsub.s32 1, %v250
    %v252 = vrot.slane %v243, %v251
    %v253 = vlaneseq
    %v254 = vshrl.u32 %v253, 7
    %v255 = vsub.s32 2, %v254
    %v256 = vrot.slane %v243, %v255
    %v257 = vlaneseq
    %v258 = vshrl.u32 %v257, 7
    %v259 = vsub.s32 3, %v258
    %v260 = vrot.slane %v243, %v259
    %v261 = vlaneseq
    %v262 = vshrl.u32 %v261, 7
    %v263 = vsub.s32 4, %v262
    %v264 = vrot.slane %v243, %v263
    %v265 = vlaneseq
    %v266 = vshrl.u32 %v265, 7
    %v267 = vsub.s32 5, %v266
    %v268 = vrot.slane %v243, %v267
    %v269 = vlaneseq
    %v270 = vshrl.u32 %v269, 7
    %v271 = vsub.s32 6, %v270
    %v272 = vrot.slane %v243, %v271
    %v273 = vlaneseq
    %v274 = vshrl.u32 %v273, 7
    %v275 = vsub.s32 7, %v274
    %v276 = vrot.slane %v243, %v275
    %v349 = vunpack.c.l.b16 %v179
    %v350 = vunpack.c.h.b16 %v179
    %v351 = vunpack.c.l.b16 %v180
    %v352 = vunpack.c.h.b16 %v180
    %v353 = vunpack.c.l.b16 %v181
    %v354 = vunpack.c.h.b16 %v181
    %v355 = vunpack.c.l.b16 %v182
    %v356 = vunpack.c.h.b16 %v182
    %v357 = vunpack.c.l.b16 %v183
    %v358 = vunpack.c.h.b16 %v183
    %v359 = vunpack.c.l.b16 %v184
    %v360 = vunpack.c.h.b16 %v184
    %v361 = vunpack.c.l.b16 %v185
    %v362 = vunpack.c.h.b16 %v185
    %v363 = vunpack.c.l.b16 %v186
    %v364 = vunpack.c.h.b16 %v186
    %v365 = vunpack.c.l.b16 %v187
    %v366 = vunpack.c.h.b16 %v187
    %v367 = vunpack.c.l.b16 %v188
    %v368 = vunpack.c.h.b16 %v188
    %v369 = vunpack.c.l.b16 %v189
    %v370 = vunpack.c.h.b16 %v189
    %v371 = vunpack.c.l.b16 %v190
    %v372 = vunpack.c.h.b16 %v190
    %v373 = vunpack.c.l.b16 %v191
    %v374 = vunpack.c.h.b16 %v191
    %v375 = vunpack.c.l.b16 %v192
    %v376 = vunpack.c.h.b16 %v192
    %v377 = vunpack.c.l.b16 %v193
    %v378 = vunpack.c.h.b16 %v193
    %v379 = vunpack.c.l.b16 %v194
    %v380 = vunpack.c.h.b16 %v194
    %v381 = vunpack.c.l.b16 %v195
    %v382 = vunpack.c.h.b16 %v195
    %v383 = vunpack.c.l.b16 %v196
    %v384 = vunpack.c.h.b16 %v196
    %v385 = vunpack.c.l.b16 %v197
    %v386 = vunpack.c.h.b16 %v197
    %v387 = vunpack.c.l.b16 %v198
    %v388 = vunpack.c.h.b16 %v198
    %v389 = vunpack.c.l.b16 %v199
    %v390 = vunpack.c.h.b16 %v199
    %v391 = vunpack.c.l.b16 %v200
    %v392 = vunpack.c.h.b16 %v200
    %v393 = vunpack.c.l.b16 %v201
    %v394 = vunpack.c.h.b16 %v201
    %v395 = vunpack.c.l.b16 %v202
    %v396 = vunpack.c.h.b16 %v202
    %v397 = vunpack.c.l.b16 %v203
    %v398 = vunpack.c.h.b16 %v203
    %v399 = vunpack.c.l.b16 %v204
    %v400 = vunpack.c.h.b16 %v204
    %v401 = vunpack.c.l.b16 %v205
    %v402 = vunpack.c.h.b16 %v205
    %v403 = vunpack.c.l.b16 %v206
    %v404 = vunpack.c.h.b16 %v206
    %v405 = vunpack.c.l.b16 %v207
    %v406 = vunpack.c.h.b16 %v207
    %v407 = vunpack.c.l.b16 %v208
    %v408 = vunpack.c.h.b16 %v208
    %v409 = vunpack.c.l.b16 %v209
    %v410 = vunpack.c.h.b16 %v209
    %v411 = vunpack.c.l.b16 %v210
    %v412 = vunpack.c.h.b16 %v210
    %v413 = vunpack.c.l.b16 %v211
    %v414 = vunpack.c.h.b16 %v211
    %v415 = vunpack.c.l.b16 %v212
    %v416 = vunpack.c.h.b16 %v212
    %v417 = vunpack.c.l.b16 %v213
    %v418 = vunpack.c.h.b16 %v213
    %v419 = vunpack.c.l.b16 %v214
    %v420 = vunpack.c.h.b16 %v214
    %v421 = vunpack.c.l.b16 %v215
    %v422 = vunpack.c.h.b16 %v215
    %v423 = vunpack.c.l.b16 %v216
    %v424 = vunpack.c.h.b16 %v216
    %v425 = vunpack.c.l.b16 %v217
    %v426 = vunpack.c.h.b16 %v217
    %v427 = vunpack.c.l.b16 %v218
    %v428 = vunpack.c.h.b16 %v218
    %v429 = vunpack.c.l.b16 %v219
    %v430 = vunpack.c.h.b16 %v219
    %v431 = vunpack.c.l.b16 %v220
    %v432 = vunpack.c.h.b16 %v220
    %v433 = vunpack.c.l.b16 %v221
    %v434 = vunpack.c.h.b16 %v221
    %v435 = vunpack.c.l.b16 %v222
    %v436 = vunpack.c.h.b16 %v222
    %v437 = vunpack.c.l.b16 %v223
    %v438 = vunpack.c.h.b16 %v223
    %v439 = vunpack.c.l.b16 %v224
    %v440 = vunpack.c.h.b16 %v224
    %v441 = vunpack.c.l.b16 %v225
    %v442 = vunpack.c.h.b16 %v225
    %v443 = vunpack.c.l.b16 %v226
    %v444 = vunpack.c.h.b16 %v226
    %v445 = vunpack.c.l.b16 %v227
    %v446 = vunpack.c.h.b16 %v227
    %v447 = vunpack.c.l.b16 %v228
    %v448 = vunpack.c.h.b16 %v228
    %v449 = vunpack.c.l.b16 %v229
    %v450 = vunpack.c.h.b16 %v229
    %v451 = vunpack.c.l.b16 %v230
    %v452 = vunpack.c.h.b16 %v230
    %v453 = vunpack.c.l.b16 %v231
    %v454 = vunpack.c.h.b16 %v231
    %v455 = vunpack.c.l.b16 %v232
    %v456 = vunpack.c.h.b16 %v232
    %v457 = vunpack.c.l.b16 %v233
    %v458 = vunpack.c.h.b16 %v233
    %v459 = vunpack.c.l.b16 %v234
    %v460 = vunpack.c.h.b16 %v234
    %v461 = vunpack.c.l.b16 %v235
    %v462 = vunpack.c.h.b16 %v235
    %v463 = vunpack.c.l.b16 %v236
    %v464 = vunpack.c.h.b16 %v236
    %v465 = vunpack.c.l.b16 %v237
    %v466 = vunpack.c.h.b16 %v237
    %v467 = vunpack.c.l.b16 %v238
    %v468 = vunpack.c.h.b16 %v238
    %v469 = vunpack.c.l.b16 %v239
    %v470 = vunpack.c.h.b16 %v239
    %v471 = vunpack.c.l.b16 %v240
    %v472 = vunpack.c.h.b16 %v240
    %v473 = vunpack.c.l.b16 %v241
    %v474 = vunpack.c.h.b16 %v241
    %v475 = vunpack.c.l.b16 %v242
    %v476 = vunpack.c.h.b16 %v242
    %v477 = vpack.c.b16 %v357, %v349
    %v478 = vpack.c.b16 %v358, %v350
    %v479 = vpack.c.b16 %v359, %v351
    %v480 = vpack.c.b16 %v360, %v352
    %v481 = vpack.c.b16 %v361, %v353
    %v482 = vpack.c.b16 %v362, %v354
    %v483 = vpack.c.b16 %v363, %v355
    %v484 = vpack.c.b16 %v364, %v356
    %v485 = vpack.c.b16 %v373, %v365
    %v486 = vpack.c.b16 %v374, %v366
    %v487 = vpack.c.b16 %v375, %v367
    %v488 = vpack.c.b16 %v376, %v368
    %v489 = vpack.c.b16 %v377, %v369
    %v490 = vpack.c.b16 %v378, %v370
    %v491 = vpack.c.b16 %v379, %v371
    %v492 = vpack.c.b16 %v380, %v372
    %v493 = vpack.c.b16 %v389, %v381
    %v494 = vpack.c.b16 %v390, %v382
    %v495 = vpack.c.b16 %v391, %v383
    %v496 = vpack.c.b16 %v392, %v384
    %v497 = vpack.c.b16 %v393, %v385
    %v498 = vpack.c.b16 %v394, %v386
    %v499 = vpack.c.b16 %v395, %v387
    %v500 = vpack.c.b16 %v396, %v388
    %v501 = vpack.c.b16 %v405, %v397
    %v502 = vpack.c.b16 %v406, %v398
    %v503 = vpack.c.b16 %v407, %v399
    %v504 = vpack.c.b16 %v408, %v400
    %v505 = vpack.c.b16 %v409, %v401
    %v506 = vpack.c.b16 %v410, %v402
    %v507 = vpack.c.b16 %v411, %v403
    %v508 = vpack.c.b16 %v412, %v404
    %v509 = vpack.c.b16 %v421, %v413
    %v510 = vpack.c.b16 %v422, %v414
    %v511 = vpack.c.b16 %v423, %v415
    %v512 = vpack.c.b16 %v424, %v416
    %v513 = vpack.c.b16 %v425, %v417
    %v514 = vpack.c.b16 %v426, %v418
    %v515 = vpack.c.b16 %v427, %v419
    %v516 = vpack.c.b16 %v428, %v420
    %v517 = vpack.c.b16 %v437, %v429
    %v518 = vpack.c.b16 %v438, %v430
    %v519 = vpack.c.b16 %v439, %v431
    %v520 = vpack.c.b16 %v440, %v432
    %v521 = vpack.c.b16 %v441, %v433
    %v522 = vpack.c.b16 %v442, %v434
    %v523 = vpack.c.b16 %v443, %v435
    %v524 = vpack.c.b16 %v444, %v436
    %v525 = vpack.c.b16 %v453, %v445
    %v526 = vpack.c.b16 %v454, %v446
    %v527 = vpack.c.b16 %v455, %v447
    %v528 = vpack.c.b16 %v456, %v448
    %v529 = vpack.c.b16 %v457, %v449
    %v530 = vpack.c.b16 %v458, %v450
    %v531 = vpack.c.b16 %v459, %v451
    %v532 = vpack.c.b16 %v460, %v452
    %v533 = vpack.c.b16 %v469, %v461
    %v534 = vpack.c.b16 %v470, %v462
    %v535 = vpack.c.b16 %v471, %v463
    %v536 = vpack.c.b16 %v472, %v464
    %v537 = vpack.c.b16 %v473, %v465
    %v538 = vpack.c.b16 %v474, %v466
    %v539 = vpack.c.b16 %v475, %v467
    %v540 = vpack.c.b16 %v476, %v468
    %605 = vmatprep.subr.bf16.mxu0 %v478
    %606 = vmatpush1.bf16.msra.mxu0 %v477
    %607 = vmatprep.subr.bf16.mxu0 %v486
    %608 = vmatpush1.bf16.msra.mxu0 %v485
    %609 = vmatprep.subr.bf16.mxu0 %v494
    %610 = vmatpush1.bf16.msra.mxu0 %v493
    %611 = vmatprep.subr.bf16.mxu0 %v502
    %612 = vmatpush1.bf16.msra.mxu0 %v501
    %613 = vmatprep.subr.bf16.mxu0 %v510
    %614 = vmatpush1.bf16.msra.mxu0 %v509
    %615 = vmatprep.subr.bf16.mxu0 %v518
    %616 = vmatpush1.bf16.msra.mxu0 %v517
    %617 = vmatprep.subr.bf16.mxu0 %v526
    %618 = vmatpush1.bf16.msra.mxu0 %v525
    %619 = vmatprep.subr.bf16.mxu0 %v534
    %620 = vmatpush1.bf16.msra.mxu0 %v533
    %621 = vmatprep.subr.bf16.mxu0 0
    %622 = vmatpush1.bf16.msra.mxu0 0
    %623 = vmatprep.subr.bf16.mxu0 0
    %624 = vmatpush1.bf16.msra.mxu0 0
    %625 = vmatprep.subr.bf16.mxu0 0
    %626 = vmatpush1.bf16.msra.mxu0 0
    %627 = vmatprep.subr.bf16.mxu0 0
    %628 = vmatpush1.bf16.msra.mxu0 0
    %629 = vmatprep.subr.bf16.mxu0 0
    %630 = vmatpush1.bf16.msra.mxu0 0
    %631 = vmatprep.subr.bf16.mxu0 0
    %632 = vmatpush1.bf16.msra.mxu0 0
    %633 = vmatprep.subr.bf16.mxu0 0
    %634 = vmatpush1.bf16.msra.mxu0 0
    %635 = vmatprep.subr.bf16.mxu0 0
    %636 = vmatpush1.bf16.msra.mxu0 0
    %637 = vmatprep.mubr.bf16.mxu0 0
    %638 = vmatmul.mubr.bf16.gmra.mrb[0].mxu0 %v178
    %v639 = vpop.f32.mrb[0].mxu0
    %v640 = vadd.f32 %v248, %v639
    %v641 = vpop.f32.mrb[0].mxu0
    %v642 = vadd.f32 %v252, %v641
    %v643 = vpop.f32.mrb[0].mxu0
    %v644 = vpop.f32.mrb[0].mxu0
    %645 = vdwg.mxu0
    %646 = vmatprep.subr.bf16.mxu0 %v480
    %647 = vmatpush1.bf16.msra.mxu0 %v479
    %648 = vmatprep.subr.bf16.mxu0 %v488
    %649 = vmatpush1.bf16.msra.mxu0 %v487
    %650 = vmatprep.subr.bf16.mxu0 %v496
    %651 = vmatpush1.bf16.msra.mxu0 %v495
    %652 = vmatprep.subr.bf16.mxu0 %v504
    %653 = vmatpush1.bf16.msra.mxu0 %v503
    %654 = vmatprep.subr.bf16.mxu0 %v512
    %655 = vmatpush1.bf16.msra.mxu0 %v511
    %656 = vmatprep.subr.bf16.mxu0 %v520
    %657 = vmatpush1.bf16.msra.mxu0 %v519
    %658 = vmatprep.subr.bf16.mxu0 %v528
    %659 = vmatpush1.bf16.msra.mxu0 %v527
    %660 = vmatprep.subr.bf16.mxu0 %v536
    %661 = vmatpush1.bf16.msra.mxu0 %v535
    %662 = vmatprep.subr.bf16.mxu0 0
    %663 = vmatpush1.bf16.msra.mxu0 0
    %664 = vmatprep.subr.bf16.mxu0 0
    %665 = vmatpush1.bf16.msra.mxu0 0
    %666 = vmatprep.subr.bf16.mxu0 0
    %667 = vmatpush1.bf16.msra.mxu0 0
    %668 = vmatprep.subr.bf16.mxu0 0
    %669 = vmatpush1.bf16.msra.mxu0 0
    %670 = vmatprep.subr.bf16.mxu0 0
    %671 = vmatpush1.bf16.msra.mxu0 0
    %672 = vmatprep.subr.bf16.mxu0 0
    %673 = vmatpush1.bf16.msra.mxu0 0
    %674 = vmatprep.subr.bf16.mxu0 0
    %675 = vmatpush1.bf16.msra.mxu0 0
    %676 = vmatprep.subr.bf16.mxu0 0
    %677 = vmatpush1.bf16.msra.mxu0 0
    %678 = vmatprep.mubr.bf16.mxu0 0
    %679 = vmatmul.mubr.bf16.gmra.mrb[0].mxu0 %v178
    %v680 = vpop.f32.mrb[0].mxu0
    %v681 = vadd.f32 %v256, %v680
    %v682 = vpop.f32.mrb[0].mxu0
    %v683 = vadd.f32 %v260, %v682
    %v684 = vpop.f32.mrb[0].mxu0
    %v685 = vpop.f32.mrb[0].mxu0
    %686 = vdwg.mxu0
    %687 = vmatprep.subr.bf16.mxu0 %v482
    %688 = vmatpush1.bf16.msra.mxu0 %v481
    %689 = vmatprep.subr.bf16.mxu0 %v490
    %690 = vmatpush1.bf16.msra.mxu0 %v489
    %691 = vmatprep.subr.bf16.mxu0 %v498
    %692 = vmatpush1.bf16.msra.mxu0 %v497
    %693 = vmatprep.subr.bf16.mxu0 %v506
    %694 = vmatpush1.bf16.msra.mxu0 %v505
    %695 = vmatprep.subr.bf16.mxu0 %v514
    %696 = vmatpush1.bf16.msra.mxu0 %v513
    %697 = vmatprep.subr.bf16.mxu0 %v522
    %698 = vmatpush1.bf16.msra.mxu0 %v521
    %699 = vmatprep.subr.bf16.mxu0 %v530
    %700 = vmatpush1.bf16.msra.mxu0 %v529
    %701 = vmatprep.subr.bf16.mxu0 %v538
    %702 = vmatpush1.bf16.msra.mxu0 %v537
    %703 = vmatprep.subr.bf16.mxu0 0
    %704 = vmatpush1.bf16.msra.mxu0 0
    %705 = vmatprep.subr.bf16.mxu0 0
    %706 = vmatpush1.bf16.msra.mxu0 0
    %707 = vmatprep.subr.bf16.mxu0 0
    %708 = vmatpush1.bf16.msra.mxu0 0
    %709 = vmatprep.subr.bf16.mxu0 0
    %710 = vmatpush1.bf16.msra.mxu0 0
    %711 = vmatprep.subr.bf16.mxu0 0
    %712 = vmatpush1.bf16.msra.mxu0 0
    %713 = vmatprep.subr.bf16.mxu0 0
    %714 = vmatpush1.bf16.msra.mxu0 0
    %715 = vmatprep.subr.bf16.mxu0 0
    %716 = vmatpush1.bf16.msra.mxu0 0
    %717 = vmatprep.subr.bf16.mxu0 0
    %718 = vmatpush1.bf16.msra.mxu0 0
    %719 = vmatprep.mubr.bf16.mxu0 0
    %720 = vmatmul.mubr.bf16.gmra.mrb[0].mxu0 %v178
    %v721 = vpop.f32.mrb[0].mxu0
    %v722 = vadd.f32 %v264, %v721
    %v723 = vpop.f32.mrb[0].mxu0
    %v724 = vadd.f32 %v268, %v723
    %v725 = vpop.f32.mrb[0].mxu0
    %v726 = vpop.f32.mrb[0].mxu0
    %727 = vdwg.mxu0
    %728 = vmatprep.subr.bf16.mxu0 %v484
    %729 = vmatpush1.bf16.msra.mxu0 %v483
    %730 = vmatprep.subr.bf16.mxu0 %v492
    %731 = vmatpush1.bf16.msra.mxu0 %v491
    %732 = vmatprep.subr.bf16.mxu0 %v500
    %733 = vmatpush1.bf16.msra.mxu0 %v499
    %734 = vmatprep.subr.bf16.mxu0 %v508
    %735 = vmatpush1.bf16.msra.mxu0 %v507
    %736 = vmatprep.subr.bf16.mxu0 %v516
    %737 = vmatpush1.bf16.msra.mxu0 %v515
    %738 = vmatprep.subr.bf16.mxu0 %v524
    %739 = vmatpush1.bf16.msra.mxu0 %v523
    %740 = vmatprep.subr.bf16.mxu0 %v532
    %741 = vmatpush1.bf16.msra.mxu0 %v531
    %742 = vmatprep.subr.bf16.mxu0 %v540
    %743 = vmatpush1.bf16.msra.mxu0 %v539
    %744 = vmatprep.subr.bf16.mxu0 0
    %745 = vmatpush1.bf16.msra.mxu0 0
    %746 = vmatprep.subr.bf16.mxu0 0
    %747 = vmatpush1.bf16.msra.mxu0 0
    %748 = vmatprep.subr.bf16.mxu0 0
    %749 = vmatpush1.bf16.msra.mxu0 0
    %750 = vmatprep.subr.bf16.mxu0 0
    %751 = vmatpush1.bf16.msra.mxu0 0
    %752 = vmatprep.subr.bf16.mxu0 0
    %753 = vmatpush1.bf16.msra.mxu0 0
    %754 = vmatprep.subr.bf16.mxu0 0
    %755 = vmatpush1.bf16.msra.mxu0 0
    %756 = vmatprep.subr.bf16.mxu0 0
    %757 = vmatpush1.bf16.msra.mxu0 0
    %758 = vmatprep.subr.bf16.mxu0 0
    %759 = vmatpush1.bf16.msra.mxu0 0
    %760 = vmatprep.mubr.bf16.mxu0 0
    %761 = vmatmul.mubr.bf16.gmra.mrb[0].mxu0 %v178
    %v762 = vpop.f32.mrb[0].mxu0
    %v763 = vadd.f32 %v272, %v762
    %v764 = vpop.f32.mrb[0].mxu0
    %v765 = vadd.f32 %v276, %v764
    %v766 = vpop.f32.mrb[0].mxu0
    %v767 = vpop.f32.mrb[0].mxu0
    %768 = vdwg.mxu0
    %v769 = vmax.f32 %v640, 0.0
    %v770 = vmax.f32 %v642, 0.0
    %v771 = vmax.f32 %v681, 0.0
    %v772 = vmax.f32 %v683, 0.0
    %v773 = vmax.f32 %v722, 0.0
    %v774 = vmax.f32 %v724, 0.0
    %v775 = vmax.f32 %v763, 0.0
    %v776 = vmax.f32 %v765, 0.0
    %v777 = vpack.c.bf16 %v769, %v769
    %v778 = vpack.c.bf16 %v770, %v770
    %v779 = vpack.c.bf16 %v771, %v771
    %v780 = vpack.c.bf16 %v772, %v772
    %v781 = vpack.c.bf16 %v773, %v773
    %v782 = vpack.c.bf16 %v774, %v774
    %v783 = vpack.c.bf16 %v775, %v775
    %v784 = vpack.c.bf16 %v776, %v776
    %v785 = vld [vmem:[#allocation8] sm:$0xff]
    %v786 = vld [vmem:[#allocation8 + $0x8] sm:$0xff]
    %v787 = vld [vmem:[#allocation8 + $0x10] sm:$0xff]
    %v788 = vld [vmem:[#allocation8 + $0x18] sm:$0xff]
    %v789 = vld [vmem:[#allocation8 + $0x20] sm:$0xff]
    %v790 = vld [vmem:[#allocation8 + $0x28] sm:$0xff]
    %v791 = vld [vmem:[#allocation8 + $0x30] sm:$0xff]
    %v792 = vld [vmem:[#allocation8 + $0x38] sm:$0xff]
    %v793 = vld [vmem:[#allocation8 + $0x40] sm:$0xff]
    %v794 = vld [vmem:[#allocation8 + $0x48] sm:$0xff]
    %v795 = vld [vmem:[#allocation8 + $0x50] sm:$0xff]
    %v796 = vld [vmem:[#allocation8 + $0x58] sm:$0xff]
    %v797 = vld [vmem:[#allocation8 + $0x60] sm:$0xff]
    %v798 = vld [vmem:[#allocation8 + $0x68] sm:$0xff]
    %v799 = vld [vmem:[#allocation8 + $0x70] sm:$0xff]
    %v800 = vld [vmem:[#allocation8 + $0x78] sm:$0xff]
    %v801 = vld [vmem:[#allocation8 + $0x80] sm:$0xff]
    %v802 = vld [vmem:[#allocation8 + $0x88] sm:$0xff]
    %v803 = vld [vmem:[#allocation8 + $0x90] sm:$0xff]
    %v804 = vld [vmem:[#allocation8 + $0x98] sm:$0xff]
    %v805 = vld [vmem:[#allocation8 + $0xa0] sm:$0xff]
    %v806 = vld [vmem:[#allocation8 + $0xa8] sm:$0xff]
    %v807 = vld [vmem:[#allocation8 + $0xb0] sm:$0xff]
    %v808 = vld [vmem:[#allocation8 + $0xb8] sm:$0xff]
    %v809 = vld [vmem:[#allocation8 + $0xc0] sm:$0xff]
    %v810 = vld [vmem:[#allocation8 + $0xc8] sm:$0xff]
    %v811 = vld [vmem:[#allocation8 + $0xd0] sm:$0xff]
    %v812 = vld [vmem:[#allocation8 + $0xd8] sm:$0xff]
    %v813 = vld [vmem:[#allocation8 + $0xe0] sm:$0xff]
    %v814 = vld [vmem:[#allocation8 + $0xe8] sm:$0xff]
    %v815 = vld [vmem:[#allocation8 + $0xf0] sm:$0xff]
    %v816 = vld [vmem:[#allocation8 + $0xf8] sm:$0xff]
    %v817 = vld [vmem:[#allocation8 + $0x100] sm:$0xff]
    %v818 = vld [vmem:[#allocation8 + $0x108] sm:$0xff]
    %v819 = vld [vmem:[#allocation8 + $0x110] sm:$0xff]
    %v820 = vld [vmem:[#allocation8 + $0x118] sm:$0xff]
    %v821 = vld [vmem:[#allocation8 + $0x120] sm:$0xff]
    %v822 = vld [vmem:[#allocation8 + $0x128] sm:$0xff]
    %v823 = vld [vmem:[#allocation8 + $0x130] sm:$0xff]
    %v824 = vld [vmem:[#allocation8 + $0x138] sm:$0xff]
    %v825 = vld [vmem:[#allocation8 + $0x140] sm:$0xff]
    %v826 = vld [vmem:[#allocation8 + $0x148] sm:$0xff]
    %v827 = vld [vmem:[#allocation8 + $0x150] sm:$0xff]
    %v828 = vld [vmem:[#allocation8 + $0x158] sm:$0xff]
    %v829 = vld [vmem:[#allocation8 + $0x160] sm:$0xff]
    %v830 = vld [vmem:[#allocation8 + $0x168] sm:$0xff]
    %v831 = vld [vmem:[#allocation8 + $0x170] sm:$0xff]
    %v832 = vld [vmem:[#allocation8 + $0x178] sm:$0xff]
    %v833 = vld [vmem:[#allocation8 + $0x180] sm:$0xff]
    %v834 = vld [vmem:[#allocation8 + $0x188] sm:$0xff]
    %v835 = vld [vmem:[#allocation8 + $0x190] sm:$0xff]
    %v836 = vld [vmem:[#allocation8 + $0x198] sm:$0xff]
    %v837 = vld [vmem:[#allocation8 + $0x1a0] sm:$0xff]
    %v838 = vld [vmem:[#allocation8 + $0x1a8] sm:$0xff]
    %v839 = vld [vmem:[#allocation8 + $0x1b0] sm:$0xff]
    %v840 = vld [vmem:[#allocation8 + $0x1b8] sm:$0xff]
    %v841 = vld [vmem:[#allocation8 + $0x1c0] sm:$0xff]
    %v842 = vld [vmem:[#allocation8 + $0x1c8] sm:$0xff]
    %v843 = vld [vmem:[#allocation8 + $0x1d0] sm:$0xff]
    %v844 = vld [vmem:[#allocation8 + $0x1d8] sm:$0xff]
    %v845 = vld [vmem:[#allocation8 + $0x1e0] sm:$0xff]
    %v846 = vld [vmem:[#allocation8 + $0x1e8] sm:$0xff]
    %v847 = vld [vmem:[#allocation8 + $0x1f0] sm:$0xff]
    %v848 = vld [vmem:[#allocation8 + $0x1f8] sm:$0xff]
    %v849 = vld [vmem:[#allocation8 + $0x200] sm:$0xff]
    %v850 = vld [vmem:[#allocation8 + $0x208] sm:$0xff]
    %v851 = vld [vmem:[#allocation8 + $0x210] sm:$0xff]
    %v852 = vld [vmem:[#allocation8 + $0x218] sm:$0xff]
    %v853 = vld [vmem:[#allocation8 + $0x220] sm:$0xff]
    %v854 = vld [vmem:[#allocation8 + $0x228] sm:$0xff]
    %v855 = vld [vmem:[#allocation8 + $0x230] sm:$0xff]
    %v856 = vld [vmem:[#allocation8 + $0x238] sm:$0xff]
    %v857 = vld [vmem:[#allocation8 + $0x240] sm:$0xff]
    %v858 = vld [vmem:[#allocation8 + $0x248] sm:$0xff]
    %v859 = vld [vmem:[#allocation8 + $0x250] sm:$0xff]
    %v860 = vld [vmem:[#allocation8 + $0x258] sm:$0xff]
    %v861 = vld [vmem:[#allocation8 + $0x260] sm:$0xff]
    %v862 = vld [vmem:[#allocation8 + $0x268] sm:$0xff]
    %v863 = vld [vmem:[#allocation8 + $0x270] sm:$0xff]
    %v864 = vld [vmem:[#allocation8 + $0x278] sm:$0xff]
    %v865 = vld [vmem:[#allocation8 + $0x280] sm:$0xff]
    %v866 = vld [vmem:[#allocation8 + $0x288] sm:$0xff]
    %v867 = vld [vmem:[#allocation8 + $0x290] sm:$0xff]
    %v868 = vld [vmem:[#allocation8 + $0x298] sm:$0xff]
    %v869 = vld [vmem:[#allocation8 + $0x2a0] sm:$0xff]
    %v870 = vld [vmem:[#allocation8 + $0x2a8] sm:$0xff]
    %v871 = vld [vmem:[#allocation8 + $0x2b0] sm:$0xff]
    %v872 = vld [vmem:[#allocation8 + $0x2b8] sm:$0xff]
    %v873 = vld [vmem:[#allocation8 + $0x2c0] sm:$0xff]
    %v874 = vld [vmem:[#allocation8 + $0x2c8] sm:$0xff]
    %v875 = vld [vmem:[#allocation8 + $0x2d0] sm:$0xff]
    %v876 = vld [vmem:[#allocation8 + $0x2d8] sm:$0xff]
    %v877 = vld [vmem:[#allocation8 + $0x2e0] sm:$0xff]
    %v878 = vld [vmem:[#allocation8 + $0x2e8] sm:$0xff]
    %v879 = vld [vmem:[#allocation8 + $0x2f0] sm:$0xff]
    %v880 = vld [vmem:[#allocation8 + $0x2f8] sm:$0xff]
    %v881 = vld [vmem:[#allocation8 + $0x300] sm:$0xff]
    %v882 = vld [vmem:[#allocation8 + $0x308] sm:$0xff]
    %v883 = vld [vmem:[#allocation8 + $0x310] sm:$0xff]
    %v884 = vld [vmem:[#allocation8 + $0x318] sm:$0xff]
    %v885 = vld [vmem:[#allocation8 + $0x320] sm:$0xff]
    %v886 = vld [vmem:[#allocation8 + $0x328] sm:$0xff]
    %v887 = vld [vmem:[#allocation8 + $0x330] sm:$0xff]
    %v888 = vld [vmem:[#allocation8 + $0x338] sm:$0xff]
    %v889 = vld [vmem:[#allocation8 + $0x340] sm:$0xff]
    %v890 = vld [vmem:[#allocation8 + $0x348] sm:$0xff]
    %v891 = vld [vmem:[#allocation8 + $0x350] sm:$0xff]
    %v892 = vld [vmem:[#allocation8 + $0x358] sm:$0xff]
    %v893 = vld [vmem:[#allocation8 + $0x360] sm:$0xff]
    %v894 = vld [vmem:[#allocation8 + $0x368] sm:$0xff]
    %v895 = vld [vmem:[#allocation8 + $0x370] sm:$0xff]
    %v896 = vld [vmem:[#allocation8 + $0x378] sm:$0xff]
    %v897 = vld [vmem:[#allocation8 + $0x380] sm:$0xff]
    %v898 = vld [vmem:[#allocation8 + $0x388] sm:$0xff]
    %v899 = vld [vmem:[#allocation8 + $0x390] sm:$0xff]
    %v900 = vld [vmem:[#allocation8 + $0x398] sm:$0xff]
    %v901 = vld [vmem:[#allocation8 + $0x3a0] sm:$0xff]
    %v902 = vld [vmem:[#allocation8 + $0x3a8] sm:$0xff]
    %v903 = vld [vmem:[#allocation8 + $0x3b0] sm:$0xff]
    %v904 = vld [vmem:[#allocation8 + $0x3b8] sm:$0xff]
    %v905 = vld [vmem:[#allocation8 + $0x3c0] sm:$0xff]
    %v906 = vld [vmem:[#allocation8 + $0x3c8] sm:$0xff]
    %v907 = vld [vmem:[#allocation8 + $0x3d0] sm:$0xff]
    %v908 = vld [vmem:[#allocation8 + $0x3d8] sm:$0xff]
    %v909 = vld [vmem:[#allocation8 + $0x3e0] sm:$0xff]
    %v910 = vld [vmem:[#allocation8 + $0x3e8] sm:$0xff]
    %v911 = vld [vmem:[#allocation8 + $0x3f0] sm:$0xff]
    %v912 = vld [vmem:[#allocation8 + $0x3f8] sm:$0xff]
    %v913 = vld [vmem:[#allocation8 + $0x400] sm:$0xff]
    %v914 = vld [vmem:[#allocation8 + $0x408] sm:$0xff]
    %v915 = vld [vmem:[#allocation8 + $0x410] sm:$0xff]
    %v916 = vld [vmem:[#allocation8 + $0x418] sm:$0xff]
    %v917 = vld [vmem:[#allocation8 + $0x420] sm:$0xff]
    %v918 = vld [vmem:[#allocation8 + $0x428] sm:$0xff]
    %v919 = vld [vmem:[#allocation8 + $0x430] sm:$0xff]
    %v920 = vld [vmem:[#allocation8 + $0x438] sm:$0xff]
    %v921 = vld [vmem:[#allocation8 + $0x440] sm:$0xff]
    %v922 = vld [vmem:[#allocation8 + $0x448] sm:$0xff]
    %v923 = vld [vmem:[#allocation8 + $0x450] sm:$0xff]
    %v924 = vld [vmem:[#allocation8 + $0x458] sm:$0xff]
    %v925 = vld [vmem:[#allocation8 + $0x460] sm:$0xff]
    %v926 = vld [vmem:[#allocation8 + $0x468] sm:$0xff]
    %v927 = vld [vmem:[#allocation8 + $0x470] sm:$0xff]
    %v928 = vld [vmem:[#allocation8 + $0x478] sm:$0xff]
    %v929 = vld [vmem:[#allocation8 + $0x480] sm:$0xff]
    %v930 = vld [vmem:[#allocation8 + $0x488] sm:$0xff]
    %v931 = vld [vmem:[#allocation8 + $0x490] sm:$0xff]
    %v932 = vld [vmem:[#allocation8 + $0x498] sm:$0xff]
    %v933 = vld [vmem:[#allocation8 + $0x4a0] sm:$0xff]
    %v934 = vld [vmem:[#allocation8 + $0x4a8] sm:$0xff]
    %v935 = vld [vmem:[#allocation8 + $0x4b0] sm:$0xff]
    %v936 = vld [vmem:[#allocation8 + $0x4b8] sm:$0xff]
    %v937 = vld [vmem:[#allocation8 + $0x4c0] sm:$0xff]
    %v938 = vld [vmem:[#allocation8 + $0x4c8] sm:$0xff]
    %v939 = vld [vmem:[#allocation8 + $0x4d0] sm:$0xff]
    %v940 = vld [vmem:[#allocation8 + $0x4d8] sm:$0xff]
    %v941 = vld [vmem:[#allocation8 + $0x4e0] sm:$0xff]
    %v942 = vld [vmem:[#allocation8 + $0x4e8] sm:$0xff]
    %v943 = vld [vmem:[#allocation8 + $0x4f0] sm:$0xff]
    %v944 = vld [vmem:[#allocation8 + $0x4f8] sm:$0xff]
    %v945 = vld [vmem:[#allocation8 + $0x500] sm:$0xff]
    %v946 = vld [vmem:[#allocation8 + $0x508] sm:$0xff]
    %v947 = vld [vmem:[#allocation8 + $0x510] sm:$0xff]
    %v948 = vld [vmem:[#allocation8 + $0x518] sm:$0xff]
    %v949 = vld [vmem:[#allocation8 + $0x520] sm:$0xff]
    %v950 = vld [vmem:[#allocation8 + $0x528] sm:$0xff]
    %v951 = vld [vmem:[#allocation8 + $0x530] sm:$0xff]
    %v952 = vld [vmem:[#allocation8 + $0x538] sm:$0xff]
    %v953 = vld [vmem:[#allocation8 + $0x540] sm:$0xff]
    %v954 = vld [vmem:[#allocation8 + $0x548] sm:$0xff]
    %v955 = vld [vmem:[#allocation8 + $0x550] sm:$0xff]
    %v956 = vld [vmem:[#allocation8 + $0x558] sm:$0xff]
    %v957 = vld [vmem:[#allocation8 + $0x560] sm:$0xff]
    %v958 = vld [vmem:[#allocation8 + $0x568] sm:$0xff]
    %v959 = vld [vmem:[#allocation8 + $0x570] sm:$0xff]
    %v960 = vld [vmem:[#allocation8 + $0x578] sm:$0xff]
    %v961 = vld [vmem:[#allocation8 + $0x580] sm:$0xff]
    %v962 = vld [vmem:[#allocation8 + $0x588] sm:$0xff]
    %v963 = vld [vmem:[#allocation8 + $0x590] sm:$0xff]
    %v964 = vld [vmem:[#allocation8 + $0x598] sm:$0xff]
    %v965 = vld [vmem:[#allocation8 + $0x5a0] sm:$0xff]
    %v966 = vld [vmem:[#allocation8 + $0x5a8] sm:$0xff]
    %v967 = vld [vmem:[#allocation8 + $0x5b0] sm:$0xff]
    %v968 = vld [vmem:[#allocation8 + $0x5b8] sm:$0xff]
    %v969 = vld [vmem:[#allocation8 + $0x5c0] sm:$0xff]
    %v970 = vld [vmem:[#allocation8 + $0x5c8] sm:$0xff]
    %v971 = vld [vmem:[#allocation8 + $0x5d0] sm:$0xff]
    %v972 = vld [vmem:[#allocation8 + $0x5d8] sm:$0xff]
    %v973 = vld [vmem:[#allocation8 + $0x5e0] sm:$0xff]
    %v974 = vld [vmem:[#allocation8 + $0x5e8] sm:$0xff]
    %v975 = vld [vmem:[#allocation8 + $0x5f0] sm:$0xff]
    %v976 = vld [vmem:[#allocation8 + $0x5f8] sm:$0xff]
    %v977 = vld [vmem:[#allocation8 + $0x600] sm:$0xff]
    %v978 = vld [vmem:[#allocation8 + $0x608] sm:$0xff]
    %v979 = vld [vmem:[#allocation8 + $0x610] sm:$0xff]
    %v980 = vld [vmem:[#allocation8 + $0x618] sm:$0xff]
    %v981 = vld [vmem:[#allocation8 + $0x620] sm:$0xff]
    %v982 = vld [vmem:[#allocation8 + $0x628] sm:$0xff]
    %v983 = vld [vmem:[#allocation8 + $0x630] sm:$0xff]
    %v984 = vld [vmem:[#allocation8 + $0x638] sm:$0xff]
    %v985 = vld [vmem:[#allocation8 + $0x640] sm:$0xff]
    %v986 = vld [vmem:[#allocation8 + $0x648] sm:$0xff]
    %v987 = vld [vmem:[#allocation8 + $0x650] sm:$0xff]
    %v988 = vld [vmem:[#allocation8 + $0x658] sm:$0xff]
    %v989 = vld [vmem:[#allocation8 + $0x660] sm:$0xff]
    %v990 = vld [vmem:[#allocation8 + $0x668] sm:$0xff]
    %v991 = vld [vmem:[#allocation8 + $0x670] sm:$0xff]
    %v992 = vld [vmem:[#allocation8 + $0x678] sm:$0xff]
    %v993 = vld [vmem:[#allocation8 + $0x680] sm:$0xff]
    %v994 = vld [vmem:[#allocation8 + $0x688] sm:$0xff]
    %v995 = vld [vmem:[#allocation8 + $0x690] sm:$0xff]
    %v996 = vld [vmem:[#allocation8 + $0x698] sm:$0xff]
    %v997 = vld [vmem:[#allocation8 + $0x6a0] sm:$0xff]
    %v998 = vld [vmem:[#allocation8 + $0x6a8] sm:$0xff]
    %v999 = vld [vmem:[#allocation8 + $0x6b0] sm:$0xff]
    %v1000 = vld [vmem:[#allocation8 + $0x6b8] sm:$0xff]
    %v1001 = vld [vmem:[#allocation8 + $0x6c0] sm:$0xff]
    %v1002 = vld [vmem:[#allocation8 + $0x6c8] sm:$0xff]
    %v1003 = vld [vmem:[#allocation8 + $0x6d0] sm:$0xff]
    %v1004 = vld [vmem:[#allocation8 + $0x6d8] sm:$0xff]
    %v1005 = vld [vmem:[#allocation8 + $0x6e0] sm:$0xff]
    %v1006 = vld [vmem:[#allocation8 + $0x6e8] sm:$0xff]
    %v1007 = vld [vmem:[#allocation8 + $0x6f0] sm:$0xff]
    %v1008 = vld [vmem:[#allocation8 + $0x6f8] sm:$0xff]
    %v1009 = vld [vmem:[#allocation8 + $0x700] sm:$0xff]
    %v1010 = vld [vmem:[#allocation8 + $0x708] sm:$0xff]
    %v1011 = vld [vmem:[#allocation8 + $0x710] sm:$0xff]
    %v1012 = vld [vmem:[#allocation8 + $0x718] sm:$0xff]
    %v1013 = vld [vmem:[#allocation8 + $0x720] sm:$0xff]
    %v1014 = vld [vmem:[#allocation8 + $0x728] sm:$0xff]
    %v1015 = vld [vmem:[#allocation8 + $0x730] sm:$0xff]
    %v1016 = vld [vmem:[#allocation8 + $0x738] sm:$0xff]
    %v1017 = vld [vmem:[#allocation8 + $0x740] sm:$0xff]
    %v1018 = vld [vmem:[#allocation8 + $0x748] sm:$0xff]
    %v1019 = vld [vmem:[#allocation8 + $0x750] sm:$0xff]
    %v1020 = vld [vmem:[#allocation8 + $0x758] sm:$0xff]
    %v1021 = vld [vmem:[#allocation8 + $0x760] sm:$0xff]
    %v1022 = vld [vmem:[#allocation8 + $0x768] sm:$0xff]
    %v1023 = vld [vmem:[#allocation8 + $0x770] sm:$0xff]
    %v1024 = vld [vmem:[#allocation8 + $0x778] sm:$0xff]
    %v1025 = vld [vmem:[#allocation8 + $0x780] sm:$0xff]
    %v1026 = vld [vmem:[#allocation8 + $0x788] sm:$0xff]
    %v1027 = vld [vmem:[#allocation8 + $0x790] sm:$0xff]
    %v1028 = vld [vmem:[#allocation8 + $0x798] sm:$0xff]
    %v1029 = vld [vmem:[#allocation8 + $0x7a0] sm:$0xff]
    %v1030 = vld [vmem:[#allocation8 + $0x7a8] sm:$0xff]
    %v1031 = vld [vmem:[#allocation8 + $0x7b0] sm:$0xff]
    %v1032 = vld [vmem:[#allocation8 + $0x7b8] sm:$0xff]
    %v1033 = vld [vmem:[#allocation8 + $0x7c0] sm:$0xff]
    %v1034 = vld [vmem:[#allocation8 + $0x7c8] sm:$0xff]
    %v1035 = vld [vmem:[#allocation8 + $0x7d0] sm:$0xff]
    %v1036 = vld [vmem:[#allocation8 + $0x7d8] sm:$0xff]
    %v1037 = vld [vmem:[#allocation8 + $0x7e0] sm:$0xff]
    %v1038 = vld [vmem:[#allocation8 + $0x7e8] sm:$0xff]
    %v1039 = vld [vmem:[#allocation8 + $0x7f0] sm:$0xff]
    %v1040 = vld [vmem:[#allocation8 + $0x7f8] sm:$0xff]
    %v1041 = vld [vmem:[#allocation10] sm:$0xf]
    %v1043 = vlaneseq
    %v1044 = vshrl.u32 %v1043, 7
    %v1045 = vsub.s32 0, %v1044
    %v1046 = vrot.slane %v1041, %v1045
    %v1047 = vlaneseq
    %v1048 = vshrl.u32 %v1047, 7
    %v1049 = vsub.s32 1, %v1048
    %v1050 = vrot.slane %v1041, %v1049
    %v1051 = vlaneseq
    %v1052 = vshrl.u32 %v1051, 7
    %v1053 = vsub.s32 2, %v1052
    %v1054 = vrot.slane %v1041, %v1053
    %v1055 = vlaneseq
    %v1056 = vshrl.u32 %v1055, 7
    %v1057 = vsub.s32 3, %v1056
    %v1058 = vrot.slane %v1041, %v1057
    %v1319 = vunpack.c.l.b16 %v785
    %v1320 = vunpack.c.h.b16 %v785
    %v1321 = vunpack.c.l.b16 %v786
    %v1322 = vunpack.c.h.b16 %v786
    %v1323 = vunpack.c.l.b16 %v787
    %v1324 = vunpack.c.h.b16 %v787
    %v1325 = vunpack.c.l.b16 %v788
    %v1326 = vunpack.c.h.b16 %v788
    %v1327 = vunpack.c.l.b16 %v789
    %v1328 = vunpack.c.h.b16 %v789
    %v1329 = vunpack.c.l.b16 %v790
    %v1330 = vunpack.c.h.b16 %v790
    %v1331 = vunpack.c.l.b16 %v791
    %v1332 = vunpack.c.h.b16 %v791
    %v1333 = vunpack.c.l.b16 %v792
    %v1334 = vunpack.c.h.b16 %v792
    %v1335 = vunpack.c.l.b16 %v793
    %v1336 = vunpack.c.h.b16 %v793
    %v1337 = vunpack.c.l.b16 %v794
    %v1338 = vunpack.c.h.b16 %v794
    %v1339 = vunpack.c.l.b16 %v795
    %v1340 = vunpack.c.h.b16 %v795
    %v1341 = vunpack.c.l.b16 %v796
    %v1342 = vunpack.c.h.b16 %v796
    %v1343 = vunpack.c.l.b16 %v797
    %v1344 = vunpack.c.h.b16 %v797
    %v1345 = vunpack.c.l.b16 %v798
    %v1346 = vunpack.c.h.b16 %v798
    %v1347 = vunpack.c.l.b16 %v799
    %v1348 = vunpack.c.h.b16 %v799
    %v1349 = vunpack.c.l.b16 %v800
    %v1350 = vunpack.c.h.b16 %v800
    %v1351 = vunpack.c.l.b16 %v801
    %v1352 = vunpack.c.h.b16 %v801
    %v1353 = vunpack.c.l.b16 %v802
    %v1354 = vunpack.c.h.b16 %v802
    %v1355 = vunpack.c.l.b16 %v803
    %v1356 = vunpack.c.h.b16 %v803
    %v1357 = vunpack.c.l.b16 %v804
    %v1358 = vunpack.c.h.b16 %v804
    %v1359 = vunpack.c.l.b16 %v805
    %v1360 = vunpack.c.h.b16 %v805
    %v1361 = vunpack.c.l.b16 %v806
    %v1362 = vunpack.c.h.b16 %v806
    %v1363 = vunpack.c.l.b16 %v807
    %v1364 = vunpack.c.h.b16 %v807
    %v1365 = vunpack.c.l.b16 %v808
    %v1366 = vunpack.c.h.b16 %v808
    %v1367 = vunpack.c.l.b16 %v809
    %v1368 = vunpack.c.h.b16 %v809
    %v1369 = vunpack.c.l.b16 %v810
    %v1370 = vunpack.c.h.b16 %v810
    %v1371 = vunpack.c.l.b16 %v811
    %v1372 = vunpack.c.h.b16 %v811
    %v1373 = vunpack.c.l.b16 %v812
    %v1374 = vunpack.c.h.b16 %v812
    %v1375 = vunpack.c.l.b16 %v813
    %v1376 = vunpack.c.h.b16 %v813
    %v1377 = vunpack.c.l.b16 %v814
    %v1378 = vunpack.c.h.b16 %v814
    %v1379 = vunpack.c.l.b16 %v815
    %v1380 = vunpack.c.h.b16 %v815
    %v1381 = vunpack.c.l.b16 %v816
    %v1382 = vunpack.c.h.b16 %v816
    %v1383 = vunpack.c.l.b16 %v817
    %v1384 = vunpack.c.h.b16 %v817
    %v1385 = vunpack.c.l.b16 %v818
    %v1386 = vunpack.c.h.b16 %v818
    %v1387 = vunpack.c.l.b16 %v819
    %v1388 = vunpack.c.h.b16 %v819
    %v1389 = vunpack.c.l.b16 %v820
    %v1390 = vunpack.c.h.b16 %v820
    %v1391 = vunpack.c.l.b16 %v821
    %v1392 = vunpack.c.h.b16 %v821
    %v1393 = vunpack.c.l.b16 %v822
    %v1394 = vunpack.c.h.b16 %v822
    %v1395 = vunpack.c.l.b16 %v823
    %v1396 = vunpack.c.h.b16 %v823
    %v1397 = vunpack.c.l.b16 %v824
    %v1398 = vunpack.c.h.b16 %v824
    %v1399 = vunpack.c.l.b16 %v825
    %v1400 = vunpack.c.h.b16 %v825
    %v1401 = vunpack.c.l.b16 %v826
    %v1402 = vunpack.c.h.b16 %v826
    %v1403 = vunpack.c.l.b16 %v827
    %v1404 = vunpack.c.h.b16 %v827
    %v1405 = vunpack.c.l.b16 %v828
    %v1406 = vunpack.c.h.b16 %v828
    %v1407 = vunpack.c.l.b16 %v829
    %v1408 = vunpack.c.h.b16 %v829
    %v1409 = vunpack.c.l.b16 %v830
    %v1410 = vunpack.c.h.b16 %v830
    %v1411 = vunpack.c.l.b16 %v831
    %v1412 = vunpack.c.h.b16 %v831
    %v1413 = vunpack.c.l.b16 %v832
    %v1414 = vunpack.c.h.b16 %v832
    %v1415 = vunpack.c.l.b16 %v833
    %v1416 = vunpack.c.h.b16 %v833
    %v1417 = vunpack.c.l.b16 %v834
    %v1418 = vunpack.c.h.b16 %v834
    %v1419 = vunpack.c.l.b16 %v835
    %v1420 = vunpack.c.h.b16 %v835
    %v1421 = vunpack.c.l.b16 %v836
    %v1422 = vunpack.c.h.b16 %v836
    %v1423 = vunpack.c.l.b16 %v837
    %v1424 = vunpack.c.h.b16 %v837
    %v1425 = vunpack.c.l.b16 %v838
    %v1426 = vunpack.c.h.b16 %v838
    %v1427 = vunpack.c.l.b16 %v839
    %v1428 = vunpack.c.h.b16 %v839
    %v1429 = vunpack.c.l.b16 %v840
    %v1430 = vunpack.c.h.b16 %v840
    %v1431 = vunpack.c.l.b16 %v841
    %v1432 = vunpack.c.h.b16 %v841
    %v1433 = vunpack.c.l.b16 %v842
    %v1434 = vunpack.c.h.b16 %v842
    %v1435 = vunpack.c.l.b16 %v843
    %v1436 = vunpack.c.h.b16 %v843
    %v1437 = vunpack.c.l.b16 %v844
    %v1438 = vunpack.c.h.b16 %v844
    %v1439 = vunpack.c.l.b16 %v845
    %v1440 = vunpack.c.h.b16 %v845
    %v1441 = vunpack.c.l.b16 %v846
    %v1442 = vunpack.c.h.b16 %v846
    %v1443 = vunpack.c.l.b16 %v847
    %v1444 = vunpack.c.h.b16 %v847
    %v1445 = vunpack.c.l.b16 %v848
    %v1446 = vunpack.c.h.b16 %v848
    %v1447 = vunpack.c.l.b16 %v849
    %v1448 = vunpack.c.h.b16 %v849
    %v1449 = vunpack.c.l.b16 %v850
    %v1450 = vunpack.c.h.b16 %v850
    %v1451 = vunpack.c.l.b16 %v851
    %v1452 = vunpack.c.h.b16 %v851
    %v1453 = vunpack.c.l.b16 %v852
    %v1454 = vunpack.c.h.b16 %v852
    %v1455 = vunpack.c.l.b16 %v853
    %v1456 = vunpack.c.h.b16 %v853
    %v1457 = vunpack.c.l.b16 %v854
    %v1458 = vunpack.c.h.b16 %v854
    %v1459 = vunpack.c.l.b16 %v855
    %v1460 = vunpack.c.h.b16 %v855
    %v1461 = vunpack.c.l.b16 %v856
    %v1462 = vunpack.c.h.b16 %v856
    %v1463 = vunpack.c.l.b16 %v857
    %v1464 = vunpack.c.h.b16 %v857
    %v1465 = vunpack.c.l.b16 %v858
    %v1466 = vunpack.c.h.b16 %v858
    %v1467 = vunpack.c.l.b16 %v859
    %v1468 = vunpack.c.h.b16 %v859
    %v1469 = vunpack.c.l.b16 %v860
    %v1470 = vunpack.c.h.b16 %v860
    %v1471 = vunpack.c.l.b16 %v861
    %v1472 = vunpack.c.h.b16 %v861
    %v1473 = vunpack.c.l.b16 %v862
    %v1474 = vunpack.c.h.b16 %v862
    %v1475 = vunpack.c.l.b16 %v863
    %v1476 = vunpack.c.h.b16 %v863
    %v1477 = vunpack.c.l.b16 %v864
    %v1478 = vunpack.c.h.b16 %v864
    %v1479 = vunpack.c.l.b16 %v865
    %v1480 = vunpack.c.h.b16 %v865
    %v1481 = vunpack.c.l.b16 %v866
    %v1482 = vunpack.c.h.b16 %v866
    %v1483 = vunpack.c.l.b16 %v867
    %v1484 = vunpack.c.h.b16 %v867
    %v1485 = vunpack.c.l.b16 %v868
    %v1486 = vunpack.c.h.b16 %v868
    %v1487 = vunpack.c.l.b16 %v869
    %v1488 = vunpack.c.h.b16 %v869
    %v1489 = vunpack.c.l.b16 %v870
    %v1490 = vunpack.c.h.b16 %v870
    %v1491 = vunpack.c.l.b16 %v871
    %v1492 = vunpack.c.h.b16 %v871
    %v1493 = vunpack.c.l.b16 %v872
    %v1494 = vunpack.c.h.b16 %v872
    %v1495 = vunpack.c.l.b16 %v873
    %v1496 = vunpack.c.h.b16 %v873
    %v1497 = vunpack.c.l.b16 %v874
    %v1498 = vunpack.c.h.b16 %v874
    %v1499 = vunpack.c.l.b16 %v875
    %v1500 = vunpack.c.h.b16 %v875
    %v1501 = vunpack.c.l.b16 %v876
    %v1502 = vunpack.c.h.b16 %v876
    %v1503 = vunpack.c.l.b16 %v877
    %v1504 = vunpack.c.h.b16 %v877
    %v1505 = vunpack.c.l.b16 %v878
    %v1506 = vunpack.c.h.b16 %v878
    %v1507 = vunpack.c.l.b16 %v879
    %v1508 = vunpack.c.h.b16 %v879
    %v1509 = vunpack.c.l.b16 %v880
    %v1510 = vunpack.c.h.b16 %v880
    %v1511 = vunpack.c.l.b16 %v881
    %v1512 = vunpack.c.h.b16 %v881
    %v1513 = vunpack.c.l.b16 %v882
    %v1514 = vunpack.c.h.b16 %v882
    %v1515 = vunpack.c.l.b16 %v883
    %v1516 = vunpack.c.h.b16 %v883
    %v1517 = vunpack.c.l.b16 %v884
    %v1518 = vunpack.c.h.b16 %v884
    %v1519 = vunpack.c.l.b16 %v885
    %v1520 = vunpack.c.h.b16 %v885
    %v1521 = vunpack.c.l.b16 %v886
    %v1522 = vunpack.c.h.b16 %v886
    %v1523 = vunpack.c.l.b16 %v887
    %v1524 = vunpack.c.h.b16 %v887
    %v1525 = vunpack.c.l.b16 %v888
    %v1526 = vunpack.c.h.b16 %v888
    %v1527 = vunpack.c.l.b16 %v889
    %v1528 = vunpack.c.h.b16 %v889
    %v1529 = vunpack.c.l.b16 %v890
    %v1530 = vunpack.c.h.b16 %v890
    %v1531 = vunpack.c.l.b16 %v891
    %v1532 = vunpack.c.h.b16 %v891
    %v1533 = vunpack.c.l.b16 %v892
    %v1534 = vunpack.c.h.b16 %v892
    %v1535 = vunpack.c.l.b16 %v893
    %v1536 = vunpack.c.h.b16 %v893
    %v1537 = vunpack.c.l.b16 %v894
    %v1538 = vunpack.c.h.b16 %v894
    %v1539 = vunpack.c.l.b16 %v895
    %v1540 = vunpack.c.h.b16 %v895
    %v1541 = vunpack.c.l.b16 %v896
    %v1542 = vunpack.c.h.b16 %v896
    %v1543 = vunpack.c.l.b16 %v897
    %v1544 = vunpack.c.h.b16 %v897
    %v1545 = vunpack.c.l.b16 %v898
    %v1546 = vunpack.c.h.b16 %v898
    %v1547 = vunpack.c.l.b16 %v899
    %v1548 = vunpack.c.h.b16 %v899
    %v1549 = vunpack.c.l.b16 %v900
    %v1550 = vunpack.c.h.b16 %v900
    %v1551 = vunpack.c.l.b16 %v901
    %v1552 = vunpack.c.h.b16 %v901
    %v1553 = vunpack.c.l.b16 %v902
    %v1554 = vunpack.c.h.b16 %v902
    %v1555 = vunpack.c.l.b16 %v903
    %v1556 = vunpack.c.h.b16 %v903
    %v1557 = vunpack.c.l.b16 %v904
    %v1558 = vunpack.c.h.b16 %v904
    %v1559 = vunpack.c.l.b16 %v905
    %v1560 = vunpack.c.h.b16 %v905
    %v1561 = vunpack.c.l.b16 %v906
    %v1562 = vunpack.c.h.b16 %v906
    %v1563 = vunpack.c.l.b16 %v907
    %v1564 = vunpack.c.h.b16 %v907
    %v1565 = vunpack.c.l.b16 %v908
    %v1566 = vunpack.c.h.b16 %v908
    %v1567 = vunpack.c.l.b16 %v909
    %v1568 = vunpack.c.h.b16 %v909
    %v1569 = vunpack.c.l.b16 %v910
    %v1570 = vunpack.c.h.b16 %v910
    %v1571 = vunpack.c.l.b16 %v911
    %v1572 = vunpack.c.h.b16 %v911
    %v1573 = vunpack.c.l.b16 %v912
    %v1574 = vunpack.c.h.b16 %v912
    %v1575 = vunpack.c.l.b16 %v913
    %v1576 = vunpack.c.h.b16 %v913
    %v1577 = vunpack.c.l.b16 %v914
    %v1578 = vunpack.c.h.b16 %v914
    %v1579 = vunpack.c.l.b16 %v915
    %v1580 = vunpack.c.h.b16 %v915
    %v1581 = vunpack.c.l.b16 %v916
    %v1582 = vunpack.c.h.b16 %v916
    %v1583 = vunpack.c.l.b16 %v917
    %v1584 = vunpack.c.h.b16 %v917
    %v1585 = vunpack.c.l.b16 %v918
    %v1586 = vunpack.c.h.b16 %v918
    %v1587 = vunpack.c.l.b16 %v919
    %v1588 = vunpack.c.h.b16 %v919
    %v1589 = vunpack.c.l.b16 %v920
    %v1590 = vunpack.c.h.b16 %v920
    %v1591 = vunpack.c.l.b16 %v921
    %v1592 = vunpack.c.h.b16 %v921
    %v1593 = vunpack.c.l.b16 %v922
    %v1594 = vunpack.c.h.b16 %v922
    %v1595 = vunpack.c.l.b16 %v923
    %v1596 = vunpack.c.h.b16 %v923
    %v1597 = vunpack.c.l.b16 %v924
    %v1598 = vunpack.c.h.b16 %v924
    %v1599 = vunpack.c.l.b16 %v925
    %v1600 = vunpack.c.h.b16 %v925
    %v1601 = vunpack.c.l.b16 %v926
    %v1602 = vunpack.c.h.b16 %v926
    %v1603 = vunpack.c.l.b16 %v927
    %v1604 = vunpack.c.h.b16 %v927
    %v1605 = vunpack.c.l.b16 %v928
    %v1606 = vunpack.c.h.b16 %v928
    %v1607 = vunpack.c.l.b16 %v929
    %v1608 = vunpack.c.h.b16 %v929
    %v1609 = vunpack.c.l.b16 %v930
    %v1610 = vunpack.c.h.b16 %v930
    %v1611 = vunpack.c.l.b16 %v931
    %v1612 = vunpack.c.h.b16 %v931
    %v1613 = vunpack.c.l.b16 %v932
    %v1614 = vunpack.c.h.b16 %v932
    %v1615 = vunpack.c.l.b16 %v933
    %v1616 = vunpack.c.h.b16 %v933
    %v1617 = vunpack.c.l.b16 %v934
    %v1618 = vunpack.c.h.b16 %v934
    %v1619 = vunpack.c.l.b16 %v935
    %v1620 = vunpack.c.h.b16 %v935
    %v1621 = vunpack.c.l.b16 %v936
    %v1622 = vunpack.c.h.b16 %v936
    %v1623 = vunpack.c.l.b16 %v937
    %v1624 = vunpack.c.h.b16 %v937
    %v1625 = vunpack.c.l.b16 %v938
    %v1626 = vunpack.c.h.b16 %v938
    %v1627 = vunpack.c.l.b16 %v939
    %v1628 = vunpack.c.h.b16 %v939
    %v1629 = vunpack.c.l.b16 %v940
    %v1630 = vunpack.c.h.b16 %v940
    %v1631 = vunpack.c.l.b16 %v941
    %v1632 = vunpack.c.h.b16 %v941
    %v1633 = vunpack.c.l.b16 %v942
    %v1634 = vunpack.c.h.b16 %v942
    %v1635 = vunpack.c.l.b16 %v943
    %v1636 = vunpack.c.h.b16 %v943
    %v1637 = vunpack.c.l.b16 %v944
    %v1638 = vunpack.c.h.b16 %v944
    %v1639 = vunpack.c.l.b16 %v945
    %v1640 = vunpack.c.h.b16 %v945
    %v1641 = vunpack.c.l.b16 %v946
    %v1642 = vunpack.c.h.b16 %v946
    %v1643 = vunpack.c.l.b16 %v947
    %v1644 = vunpack.c.h.b16 %v947
    %v1645 = vunpack.c.l.b16 %v948
    %v1646 = vunpack.c.h.b16 %v948
    %v1647 = vunpack.c.l.b16 %v949
    %v1648 = vunpack.c.h.b16 %v949
    %v1649 = vunpack.c.l.b16 %v950
    %v1650 = vunpack.c.h.b16 %v950
    %v1651 = vunpack.c.l.b16 %v951
    %v1652 = vunpack.c.h.b16 %v951
    %v1653 = vunpack.c.l.b16 %v952
    %v1654 = vunpack.c.h.b16 %v952
    %v1655 = vunpack.c.l.b16 %v953
    %v1656 = vunpack.c.h.b16 %v953
    %v1657 = vunpack.c.l.b16 %v954
    %v1658 = vunpack.c.h.b16 %v954
    %v1659 = vunpack.c.l.b16 %v955
    %v1660 = vunpack.c.h.b16 %v955
    %v1661 = vunpack.c.l.b16 %v956
    %v1662 = vunpack.c.h.b16 %v956
    %v1663 = vunpack.c.l.b16 %v957
    %v1664 = vunpack.c.h.b16 %v957
    %v1665 = vunpack.c.l.b16 %v958
    %v1666 = vunpack.c.h.b16 %v958
    %v1667 = vunpack.c.l.b16 %v959
    %v1668 = vunpack.c.h.b16 %v959
    %v1669 = vunpack.c.l.b16 %v960
    %v1670 = vunpack.c.h.b16 %v960
    %v1671 = vunpack.c.l.b16 %v961
    %v1672 = vunpack.c.h.b16 %v961
    %v1673 = vunpack.c.l.b16 %v962
    %v1674 = vunpack.c.h.b16 %v962
    %v1675 = vunpack.c.l.b16 %v963
    %v1676 = vunpack.c.h.b16 %v963
    %v1677 = vunpack.c.l.b16 %v964
    %v1678 = vunpack.c.h.b16 %v964
    %v1679 = vunpack.c.l.b16 %v965
    %v1680 = vunpack.c.h.b16 %v965
    %v1681 = vunpack.c.l.b16 %v966
    %v1682 = vunpack.c.h.b16 %v966
    %v1683 = vunpack.c.l.b16 %v967
    %v1684 = vunpack.c.h.b16 %v967
    %v1685 = vunpack.c.l.b16 %v968
    %v1686 = vunpack.c.h.b16 %v968
    %v1687 = vunpack.c.l.b16 %v969
    %v1688 = vunpack.c.h.b16 %v969
    %v1689 = vunpack.c.l.b16 %v970
    %v1690 = vunpack.c.h.b16 %v970
    %v1691 = vunpack.c.l.b16 %v971
    %v1692 = vunpack.c.h.b16 %v971
    %v1693 = vunpack.c.l.b16 %v972
    %v1694 = vunpack.c.h.b16 %v972
    %v1695 = vunpack.c.l.b16 %v973
    %v1696 = vunpack.c.h.b16 %v973
    %v1697 = vunpack.c.l.b16 %v974
    %v1698 = vunpack.c.h.b16 %v974
    %v1699 = vunpack.c.l.b16 %v975
    %v1700 = vunpack.c.h.b16 %v975
    %v1701 = vunpack.c.l.b16 %v976
    %v1702 = vunpack.c.h.b16 %v976
    %v1703 = vunpack.c.l.b16 %v977
    %v1704 = vunpack.c.h.b16 %v977
    %v1705 = vunpack.c.l.b16 %v978
    %v1706 = vunpack.c.h.b16 %v978
    %v1707 = vunpack.c.l.b16 %v979
    %v1708 = vunpack.c.h.b16 %v979
    %v1709 = vunpack.c.l.b16 %v980
    %v1710 = vunpack.c.h.b16 %v980
    %v1711 = vunpack.c.l.b16 %v981
    %v1712 = vunpack.c.h.b16 %v981
    %v1713 = vunpack.c.l.b16 %v982
    %v1714 = vunpack.c.h.b16 %v982
    %v1715 = vunpack.c.l.b16 %v983
    %v1716 = vunpack.c.h.b16 %v983
    %v1717 = vunpack.c.l.b16 %v984
    %v1718 = vunpack.c.h.b16 %v984
    %v1719 = vunpack.c.l.b16 %v985
    %v1720 = vunpack.c.h.b16 %v985
    %v1721 = vunpack.c.l.b16 %v986
    %v1722 = vunpack.c.h.b16 %v986
    %v1723 = vunpack.c.l.b16 %v987
    %v1724 = vunpack.c.h.b16 %v987
    %v1725 = vunpack.c.l.b16 %v988
    %v1726 = vunpack.c.h.b16 %v988
    %v1727 = vunpack.c.l.b16 %v989
    %v1728 = vunpack.c.h.b16 %v989
    %v1729 = vunpack.c.l.b16 %v990
    %v1730 = vunpack.c.h.b16 %v990
    %v1731 = vunpack.c.l.b16 %v991
    %v1732 = vunpack.c.h.b16 %v991
    %v1733 = vunpack.c.l.b16 %v992
    %v1734 = vunpack.c.h.b16 %v992
    %v1735 = vunpack.c.l.b16 %v993
    %v1736 = vunpack.c.h.b16 %v993
    %v1737 = vunpack.c.l.b16 %v994
    %v1738 = vunpack.c.h.b16 %v994
    %v1739 = vunpack.c.l.b16 %v995
    %v1740 = vunpack.c.h.b16 %v995
    %v1741 = vunpack.c.l.b16 %v996
    %v1742 = vunpack.c.h.b16 %v996
    %v1743 = vunpack.c.l.b16 %v997
    %v1744 = vunpack.c.h.b16 %v997
    %v1745 = vunpack.c.l.b16 %v998
    %v1746 = vunpack.c.h.b16 %v998
    %v1747 = vunpack.c.l.b16 %v999
    %v1748 = vunpack.c.h.b16 %v999
    %v1749 = vunpack.c.l.b16 %v1000
    %v1750 = vunpack.c.h.b16 %v1000
    %v1751 = vunpack.c.l.b16 %v1001
    %v1752 = vunpack.c.h.b16 %v1001
    %v1753 = vunpack.c.l.b16 %v1002
    %v1754 = vunpack.c.h.b16 %v1002
    %v1755 = vunpack.c.l.b16 %v1003
    %v1756 = vunpack.c.h.b16 %v1003
    %v1757 = vunpack.c.l.b16 %v1004
    %v1758 = vunpack.c.h.b16 %v1004
    %v1759 = vunpack.c.l.b16 %v1005
    %v1760 = vunpack.c.h.b16 %v1005
    %v1761 = vunpack.c.l.b16 %v1006
    %v1762 = vunpack.c.h.b16 %v1006
    %v1763 = vunpack.c.l.b16 %v1007
    %v1764 = vunpack.c.h.b16 %v1007
    %v1765 = vunpack.c.l.b16 %v1008
    %v1766 = vunpack.c.h.b16 %v1008
    %v1767 = vunpack.c.l.b16 %v1009
    %v1768 = vunpack.c.h.b16 %v1009
    %v1769 = vunpack.c.l.b16 %v1010
    %v1770 = vunpack.c.h.b16 %v1010
    %v1771 = vunpack.c.l.b16 %v1011
    %v1772 = vunpack.c.h.b16 %v1011
    %v1773 = vunpack.c.l.b16 %v1012
    %v1774 = vunpack.c.h.b16 %v1012
    %v1775 = vunpack.c.l.b16 %v1013
    %v1776 = vunpack.c.h.b16 %v1013
    %v1777 = vunpack.c.l.b16 %v1014
    %v1778 = vunpack.c.h.b16 %v1014
    %v1779 = vunpack.c.l.b16 %v1015
    %v1780 = vunpack.c.h.b16 %v1015
    %v1781 = vunpack.c.l.b16 %v1016
    %v1782 = vunpack.c.h.b16 %v1016
    %v1783 = vunpack.c.l.b16 %v1017
    %v1784 = vunpack.c.h.b16 %v1017
    %v1785 = vunpack.c.l.b16 %v1018
    %v1786 = vunpack.c.h.b16 %v1018
    %v1787 = vunpack.c.l.b16 %v1019
    %v1788 = vunpack.c.h.b16 %v1019
    %v1789 = vunpack.c.l.b16 %v1020
    %v1790 = vunpack.c.h.b16 %v1020
    %v1791 = vunpack.c.l.b16 %v1021
    %v1792 = vunpack.c.h.b16 %v1021
    %v1793 = vunpack.c.l.b16 %v1022
    %v1794 = vunpack.c.h.b16 %v1022
    %v1795 = vunpack.c.l.b16 %v1023
    %v1796 = vunpack.c.h.b16 %v1023
    %v1797 = vunpack.c.l.b16 %v1024
    %v1798 = vunpack.c.h.b16 %v1024
    %v1799 = vunpack.c.l.b16 %v1025
    %v1800 = vunpack.c.h.b16 %v1025
    %v1801 = vunpack.c.l.b16 %v1026
    %v1802 = vunpack.c.h.b16 %v1026
    %v1803 = vunpack.c.l.b16 %v1027
    %v1804 = vunpack.c.h.b16 %v1027
    %v1805 = vunpack.c.l.b16 %v1028
    %v1806 = vunpack.c.h.b16 %v1028
    %v1807 = vunpack.c.l.b16 %v1029
    %v1808 = vunpack.c.h.b16 %v1029
    %v1809 = vunpack.c.l.b16 %v1030
    %v1810 = vunpack.c.h.b16 %v1030
    %v1811 = vunpack.c.l.b16 %v1031
    %v1812 = vunpack.c.h.b16 %v1031
    %v1813 = vunpack.c.l.b16 %v1032
    %v1814 = vunpack.c.h.b16 %v1032
    %v1815 = vunpack.c.l.b16 %v1033
    %v1816 = vunpack.c.h.b16 %v1033
    %v1817 = vunpack.c.l.b16 %v1034
    %v1818 = vunpack.c.h.b16 %v1034
    %v1819 = vunpack.c.l.b16 %v1035
    %v1820 = vunpack.c.h.b16 %v1035
    %v1821 = vunpack.c.l.b16 %v1036
    %v1822 = vunpack.c.h.b16 %v1036
    %v1823 = vunpack.c.l.b16 %v1037
    %v1824 = vunpack.c.h.b16 %v1037
    %v1825 = vunpack.c.l.b16 %v1038
    %v1826 = vunpack.c.h.b16 %v1038
    %v1827 = vunpack.c.l.b16 %v1039
    %v1828 = vunpack.c.h.b16 %v1039
    %v1829 = vunpack.c.l.b16 %v1040
    %v1830 = vunpack.c.h.b16 %v1040
    %v1831 = vpack.c.b16 %v1323, %v1319
    %v1832 = vpack.c.b16 %v1324, %v1320
    %v1833 = vpack.c.b16 %v1325, %v1321
    %v1834 = vpack.c.b16 %v1326, %v1322
    %v1835 = vpack.c.b16 %v1331, %v1327
    %v1836 = vpack.c.b16 %v1332, %v1328
    %v1837 = vpack.c.b16 %v1333, %v1329
    %v1838 = vpack.c.b16 %v1334, %v1330
    %v1839 = vpack.c.b16 %v1339, %v1335
    %v1840 = vpack.c.b16 %v1340, %v1336
    %v1841 = vpack.c.b16 %v1341, %v1337
    %v1842 = vpack.c.b16 %v1342, %v1338
    %v1843 = vpack.c.b16 %v1347, %v1343
    %v1844 = vpack.c.b16 %v1348, %v1344
    %v1845 = vpack.c.b16 %v1349, %v1345
    %v1846 = vpack.c.b16 %v1350, %v1346
    %v1847 = vpack.c.b16 %v1355, %v1351
    %v1848 = vpack.c.b16 %v1356, %v1352
    %v1849 = vpack.c.b16 %v1357, %v1353
    %v1850 = vpack.c.b16 %v1358, %v1354
    %v1851 = vpack.c.b16 %v1363, %v1359
    %v1852 = vpack.c.b16 %v1364, %v1360
    %v1853 = vpack.c.b16 %v1365, %v1361
    %v1854 = vpack.c.b16 %v1366, %v1362
    %v1855 = vpack.c.b16 %v1371, %v1367
    %v1856 = vpack.c.b16 %v1372, %v1368
    %v1857 = vpack.c.b16 %v1373, %v1369
    %v1858 = vpack.c.b16 %v1374, %v1370
    %v1859 = vpack.c.b16 %v1379, %v1375
    %v1860 = vpack.c.b16 %v1380, %v1376
    %v1861 = vpack.c.b16 %v1381, %v1377
    %v1862 = vpack.c.b16 %v1382, %v1378
    %v1863 = vpack.c.b16 %v1387, %v1383
    %v1864 = vpack.c.b16 %v1388, %v1384
    %v1865 = vpack.c.b16 %v1389, %v1385
    %v1866 = vpack.c.b16 %v1390, %v1386
    %v1867 = vpack.c.b16 %v1395, %v1391
    %v1868 = vpack.c.b16 %v1396, %v1392
    %v1869 = vpack.c.b16 %v1397, %v1393
    %v1870 = vpack.c.b16 %v1398, %v1394
    %v1871 = vpack.c.b16 %v1403, %v1399
    %v1872 = vpack.c.b16 %v1404, %v1400
    %v1873 = vpack.c.b16 %v1405, %v1401
    %v1874 = vpack.c.b16 %v1406, %v1402
    %v1875 = vpack.c.b16 %v1411, %v1407
    %v1876 = vpack.c.b16 %v1412, %v1408
    %v1877 = vpack.c.b16 %v1413, %v1409
    %v1878 = vpack.c.b16 %v1414, %v1410
    %v1879 = vpack.c.b16 %v1419, %v1415
    %v1880 = vpack.c.b16 %v1420, %v1416
    %v1881 = vpack.c.b16 %v1421, %v1417
    %v1882 = vpack.c.b16 %v1422, %v1418
    %v1883 = vpack.c.b16 %v1427, %v1423
    %v1884 = vpack.c.b16 %v1428, %v1424
    %v1885 = vpack.c.b16 %v1429, %v1425
    %v1886 = vpack.c.b16 %v1430, %v1426
    %v1887 = vpack.c.b16 %v1435, %v1431
    %v1888 = vpack.c.b16 %v1436, %v1432
    %v1889 = vpack.c.b16 %v1437, %v1433
    %v1890 = vpack.c.b16 %v1438, %v1434
    %v1891 = vpack.c.b16 %v1443, %v1439
    %v1892 = vpack.c.b16 %v1444, %v1440
    %v1893 = vpack.c.b16 %v1445, %v1441
    %v1894 = vpack.c.b16 %v1446, %v1442
    %v1895 = vpack.c.b16 %v1451, %v1447
    %v1896 = vpack.c.b16 %v1452, %v1448
    %v1897 = vpack.c.b16 %v1453, %v1449
    %v1898 = vpack.c.b16 %v1454, %v1450
    %v1899 = vpack.c.b16 %v1459, %v1455
    %v1900 = vpack.c.b16 %v1460, %v1456
    %v1901 = vpack.c.b16 %v1461, %v1457
    %v1902 = vpack.c.b16 %v1462, %v1458
    %v1903 = vpack.c.b16 %v1467, %v1463
    %v1904 = vpack.c.b16 %v1468, %v1464
    %v1905 = vpack.c.b16 %v1469, %v1465
    %v1906 = vpack.c.b16 %v1470, %v1466
    %v1907 = vpack.c.b16 %v1475, %v1471
    %v1908 = vpack.c.b16 %v1476, %v1472
    %v1909 = vpack.c.b16 %v1477, %v1473
    %v1910 = vpack.c.b16 %v1478, %v1474
    %v1911 = vpack.c.b16 %v1483, %v1479
    %v1912 = vpack.c.b16 %v1484, %v1480
    %v1913 = vpack.c.b16 %v1485, %v1481
    %v1914 = vpack.c.b16 %v1486, %v1482
    %v1915 = vpack.c.b16 %v1491, %v1487
    %v1916 = vpack.c.b16 %v1492, %v1488
    %v1917 = vpack.c.b16 %v1493, %v1489
    %v1918 = vpack.c.b16 %v1494, %v1490
    %v1919 = vpack.c.b16 %v1499, %v1495
    %v1920 = vpack.c.b16 %v1500, %v1496
    %v1921 = vpack.c.b16 %v1501, %v1497
    %v1922 = vpack.c.b16 %v1502, %v1498
    %v1923 = vpack.c.b16 %v1507, %v1503
    %v1924 = vpack.c.b16 %v1508, %v1504
    %v1925 = vpack.c.b16 %v1509, %v1505
    %v1926 = vpack.c.b16 %v1510, %v1506
    %v1927 = vpack.c.b16 %v1515, %v1511
    %v1928 = vpack.c.b16 %v1516, %v1512
    %v1929 = vpack.c.b16 %v1517, %v1513
    %v1930 = vpack.c.b16 %v1518, %v1514
    %v1931 = vpack.c.b16 %v1523, %v1519
    %v1932 = vpack.c.b16 %v1524, %v1520
    %v1933 = vpack.c.b16 %v1525, %v1521
    %v1934 = vpack.c.b16 %v1526, %v1522
    %v1935 = vpack.c.b16 %v1531, %v1527
    %v1936 = vpack.c.b16 %v1532, %v1528
    %v1937 = vpack.c.b16 %v1533, %v1529
    %v1938 = vpack.c.b16 %v1534, %v1530
    %v1939 = vpack.c.b16 %v1539, %v1535
    %v1940 = vpack.c.b16 %v1540, %v1536
    %v1941 = vpack.c.b16 %v1541, %v1537
    %v1942 = vpack.c.b16 %v1542, %v1538
    %v1943 = vpack.c.b16 %v1547, %v1543
    %v1944 = vpack.c.b16 %v1548, %v1544
    %v1945 = vpack.c.b16 %v1549, %v1545
    %v1946 = vpack.c.b16 %v1550, %v1546
    %v1947 = vpack.c.b16 %v1555, %v1551
    %v1948 = vpack.c.b16 %v1556, %v1552
    %v1949 = vpack.c.b16 %v1557, %v1553
    %v1950 = vpack.c.b16 %v1558, %v1554
    %v1951 = vpack.c.b16 %v1563, %v1559
    %v1952 = vpack.c.b16 %v1564, %v1560
    %v1953 = vpack.c.b16 %v1565, %v1561
    %v1954 = vpack.c.b16 %v1566, %v1562
    %v1955 = vpack.c.b16 %v1571, %v1567
    %v1956 = vpack.c.b16 %v1572, %v1568
    %v1957 = vpack.c.b16 %v1573, %v1569
    %v1958 = vpack.c.b16 %v1574, %v1570
    %v1959 = vpack.c.b16 %v1579, %v1575
    %v1960 = vpack.c.b16 %v1580, %v1576
    %v1961 = vpack.c.b16 %v1581, %v1577
    %v1962 = vpack.c.b16 %v1582, %v1578
    %v1963 = vpack.c.b16 %v1587, %v1583
    %v1964 = vpack.c.b16 %v1588, %v1584
    %v1965 = vpack.c.b16 %v1589, %v1585
    %v1966 = vpack.c.b16 %v1590, %v1586
    %v1967 = vpack.c.b16 %v1595, %v1591
    %v1968 = vpack.c.b16 %v1596, %v1592
    %v1969 = vpack.c.b16 %v1597, %v1593
    %v1970 = vpack.c.b16 %v1598, %v1594
    %v1971 = vpack.c.b16 %v1603, %v1599
    %v1972 = vpack.c.b16 %v1604, %v1600
    %v1973 = vpack.c.b16 %v1605, %v1601
    %v1974 = vpack.c.b16 %v1606, %v1602
    %v1975 = vpack.c.b16 %v1611, %v1607
    %v1976 = vpack.c.b16 %v1612, %v1608
    %v1977 = vpack.c.b16 %v1613, %v1609
    %v1978 = vpack.c.b16 %v1614, %v1610
    %v1979 = vpack.c.b16 %v1619, %v1615
    %v1980 = vpack.c.b16 %v1620, %v1616
    %v1981 = vpack.c.b16 %v1621, %v1617
    %v1982 = vpack.c.b16 %v1622, %v1618
    %v1983 = vpack.c.b16 %v1627, %v1623
    %v1984 = vpack.c.b16 %v1628, %v1624
    %v1985 = vpack.c.b16 %v1629, %v1625
    %v1986 = vpack.c.b16 %v1630, %v1626
    %v1987 = vpack.c.b16 %v1635, %v1631
    %v1988 = vpack.c.b16 %v1636, %v1632
    %v1989 = vpack.c.b16 %v1637, %v1633
    %v1990 = vpack.c.b16 %v1638, %v1634
    %v1991 = vpack.c.b16 %v1643, %v1639
    %v1992 = vpack.c.b16 %v1644, %v1640
    %v1993 = vpack.c.b16 %v1645, %v1641
    %v1994 = vpack.c.b16 %v1646, %v1642
    %v1995 = vpack.c.b16 %v1651, %v1647
    %v1996 = vpack.c.b16 %v1652, %v1648
    %v1997 = vpack.c.b16 %v1653, %v1649
    %v1998 = vpack.c.b16 %v1654, %v1650
    %v1999 = vpack.c.b16 %v1659, %v1655
    %v2000 = vpack.c.b16 %v1660, %v1656
    %v2001 = vpack.c.b16 %v1661, %v1657
    %v2002 = vpack.c.b16 %v1662, %v1658
    %v2003 = vpack.c.b16 %v1667, %v1663
    %v2004 = vpack.c.b16 %v1668, %v1664
    %v2005 = vpack.c.b16 %v1669, %v1665
    %v2006 = vpack.c.b16 %v1670, %v1666
    %v2007 = vpack.c.b16 %v1675, %v1671
    %v2008 = vpack.c.b16 %v1676, %v1672
    %v2009 = vpack.c.b16 %v1677, %v1673
    %v2010 = vpack.c.b16 %v1678, %v1674
    %v2011 = vpack.c.b16 %v1683, %v1679
    %v2012 = vpack.c.b16 %v1684, %v1680
    %v2013 = vpack.c.b16 %v1685, %v1681
    %v2014 = vpack.c.b16 %v1686, %v1682
    %v2015 = vpack.c.b16 %v1691, %v1687
    %v2016 = vpack.c.b16 %v1692, %v1688
    %v2017 = vpack.c.b16 %v1693, %v1689
    %v2018 = vpack.c.b16 %v1694, %v1690
    %v2019 = vpack.c.b16 %v1699, %v1695
    %v2020 = vpack.c.b16 %v1700, %v1696
    %v2021 = vpack.c.b16 %v1701, %v1697
    %v2022 = vpack.c.b16 %v1702, %v1698
    %v2023 = vpack.c.b16 %v1707, %v1703
    %v2024 = vpack.c.b16 %v1708, %v1704
    %v2025 = vpack.c.b16 %v1709, %v1705
    %v2026 = vpack.c.b16 %v1710, %v1706
    %v2027 = vpack.c.b16 %v1715, %v1711
    %v2028 = vpack.c.b16 %v1716, %v1712
    %v2029 = vpack.c.b16 %v1717, %v1713
    %v2030 = vpack.c.b16 %v1718, %v1714
    %v2031 = vpack.c.b16 %v1723, %v1719
    %v2032 = vpack.c.b16 %v1724, %v1720
    %v2033 = vpack.c.b16 %v1725, %v1721
    %v2034 = vpack.c.b16 %v1726, %v1722
    %v2035 = vpack.c.b16 %v1731, %v1727
    %v2036 = vpack.c.b16 %v1732, %v1728
    %v2037 = vpack.c.b16 %v1733, %v1729
    %v2038 = vpack.c.b16 %v1734, %v1730
    %v2039 = vpack.c.b16 %v1739, %v1735
    %v2040 = vpack.c.b16 %v1740, %v1736
    %v2041 = vpack.c.b16 %v1741, %v1737
    %v2042 = vpack.c.b16 %v1742, %v1738
    %v2043 = vpack.c.b16 %v1747, %v1743
    %v2044 = vpack.c.b16 %v1748, %v1744
    %v2045 = vpack.c.b16 %v1749, %v1745
    %v2046 = vpack.c.b16 %v1750, %v1746
    %v2047 = vpack.c.b16 %v1755, %v1751
    %v2048 = vpack.c.b16 %v1756, %v1752
    %v2049 = vpack.c.b16 %v1757, %v1753
    %v2050 = vpack.c.b16 %v1758, %v1754
    %v2051 = vpack.c.b16 %v1763, %v1759
    %v2052 = vpack.c.b16 %v1764, %v1760
    %v2053 = vpack.c.b16 %v1765, %v1761
    %v2054 = vpack.c.b16 %v1766, %v1762
    %v2055 = vpack.c.b16 %v1771, %v1767
    %v2056 = vpack.c.b16 %v1772, %v1768
    %v2057 = vpack.c.b16 %v1773, %v1769
    %v2058 = vpack.c.b16 %v1774, %v1770
    %v2059 = vpack.c.b16 %v1779, %v1775
    %v2060 = vpack.c.b16 %v1780, %v1776
    %v2061 = vpack.c.b16 %v1781, %v1777
    %v2062 = vpack.c.b16 %v1782, %v1778
    %v2063 = vpack.c.b16 %v1787, %v1783
    %v2064 = vpack.c.b16 %v1788, %v1784
    %v2065 = vpack.c.b16 %v1789, %v1785
    %v2066 = vpack.c.b16 %v1790, %v1786
    %v2067 = vpack.c.b16 %v1795, %v1791
    %v2068 = vpack.c.b16 %v1796, %v1792
    %v2069 = vpack.c.b16 %v1797, %v1793
    %v2070 = vpack.c.b16 %v1798, %v1794
    %v2071 = vpack.c.b16 %v1803, %v1799
    %v2072 = vpack.c.b16 %v1804, %v1800
    %v2073 = vpack.c.b16 %v1805, %v1801
    %v2074 = vpack.c.b16 %v1806, %v1802
    %v2075 = vpack.c.b16 %v1811, %v1807
    %v2076 = vpack.c.b16 %v1812, %v1808
    %v2077 = vpack.c.b16 %v1813, %v1809
    %v2078 = vpack.c.b16 %v1814, %v1810
    %v2079 = vpack.c.b16 %v1819, %v1815
    %v2080 = vpack.c.b16 %v1820, %v1816
    %v2081 = vpack.c.b16 %v1821, %v1817
    %v2082 = vpack.c.b16 %v1822, %v1818
    %v2083 = vpack.c.b16 %v1827, %v1823
    %v2084 = vpack.c.b16 %v1828, %v1824
    %v2085 = vpack.c.b16 %v1829, %v1825
    %v2086 = vpack.c.b16 %v1830, %v1826
    %2343 = vmatprep.subr.bf16.mxu0 %v1832
    %2344 = vmatpush1.bf16.msra.mxu0 %v1831
    %2345 = vmatprep.subr.bf16.mxu0 %v1836
    %2346 = vmatpush1.bf16.msra.mxu0 %v1835
    %2347 = vmatprep.subr.bf16.mxu0 %v1840
    %2348 = vmatpush1.bf16.msra.mxu0 %v1839
    %2349 = vmatprep.subr.bf16.mxu0 %v1844
    %2350 = vmatpush1.bf16.msra.mxu0 %v1843
    %2351 = vmatprep.subr.bf16.mxu0 %v1848
    %2352 = vmatpush1.bf16.msra.mxu0 %v1847
    %2353 = vmatprep.subr.bf16.mxu0 %v1852
    %2354 = vmatpush1.bf16.msra.mxu0 %v1851
    %2355 = vmatprep.subr.bf16.mxu0 %v1856
    %2356 = vmatpush1.bf16.msra.mxu0 %v1855
    %2357 = vmatprep.subr.bf16.mxu0 %v1860
    %2358 = vmatpush1.bf16.msra.mxu0 %v1859
    %2359 = vmatprep.subr.bf16.mxu0 %v1864
    %2360 = vmatpush1.bf16.msra.mxu0 %v1863
    %2361 = vmatprep.subr.bf16.mxu0 %v1868
    %2362 = vmatpush1.bf16.msra.mxu0 %v1867
    %2363 = vmatprep.subr.bf16.mxu0 %v1872
    %2364 = vmatpush1.bf16.msra.mxu0 %v1871
    %2365 = vmatprep.subr.bf16.mxu0 %v1876
    %2366 = vmatpush1.bf16.msra.mxu0 %v1875
    %2367 = vmatprep.subr.bf16.mxu0 %v1880
    %2368 = vmatpush1.bf16.msra.mxu0 %v1879
    %2369 = vmatprep.subr.bf16.mxu0 %v1884
    %2370 = vmatpush1.bf16.msra.mxu0 %v1883
    %2371 = vmatprep.subr.bf16.mxu0 %v1888
    %2372 = vmatpush1.bf16.msra.mxu0 %v1887
    %2373 = vmatprep.subr.bf16.mxu0 %v1892
    %2374 = vmatpush1.bf16.msra.mxu0 %v1891
    %2375 = vmatprep.mubr.bf16.mxu0 %v778
    %2376 = vmatmul.mubr.bf16.gmra.mrb[0].mxu0 %v777
    %v2377 = vpop.f32.mrb[0].mxu0
    %v2378 = vadd.f32 %v1046, %v2377
    %v2379 = vpop.f32.mrb[0].mxu0
    %v2380 = vadd.f32 %v1050, %v2379
    %v2381 = vpop.f32.mrb[0].mxu0
    %v2382 = vpop.f32.mrb[0].mxu0
    %2383 = vdwg.mxu0
    %2384 = vmatprep.subr.bf16.mxu0 %v1896
    %2385 = vmatpush1.bf16.msra.mxu0 %v1895
    %2386 = vmatprep.subr.bf16.mxu0 %v1900
    %2387 = vmatpush1.bf16.msra.mxu0 %v1899
    %2388 = vmatprep.subr.bf16.mxu0 %v1904
    %2389 = vmatpush1.bf16.msra.mxu0 %v1903
    %2390 = vmatprep.subr.bf16.mxu0 %v1908
    %2391 = vmatpush1.bf16.msra.mxu0 %v1907
    %2392 = vmatprep.subr.bf16.mxu0 %v1912
    %2393 = vmatpush1.bf16.msra.mxu0 %v1911
    %2394 = vmatprep.subr.bf16.mxu0 %v1916
    %2395 = vmatpush1.bf16.msra.mxu0 %v1915
    %2396 = vmatprep.subr.bf16.mxu0 %v1920
    %2397 = vmatpush1.bf16.msra.mxu0 %v1919
    %2398 = vmatprep.subr.bf16.mxu0 %v1924
    %2399 = vmatpush1.bf16.msra.mxu0 %v1923
    %2400 = vmatprep.subr.bf16.mxu0 %v1928
    %2401 = vmatpush1.bf16.msra.mxu0 %v1927
    %2402 = vmatprep.subr.bf16.mxu0 %v1932
    %2403 = vmatpush1.bf16.msra.mxu0 %v1931
    %2404 = vmatprep.subr.bf16.mxu0 %v1936
    %2405 = vmatpush1.bf16.msra.mxu0 %v1935
    %2406 = vmatprep.subr.bf16.mxu0 %v1940
    %2407 = vmatpush1.bf16.msra.mxu0 %v1939
    %2408 = vmatprep.subr.bf16.mxu0 %v1944
    %2409 = vmatpush1.bf16.msra.mxu0 %v1943
    %2410 = vmatprep.subr.bf16.mxu0 %v1948
    %2411 = vmatpush1.bf16.msra.mxu0 %v1947
    %2412 = vmatprep.subr.bf16.mxu0 %v1952
    %2413 = vmatpush1.bf16.msra.mxu0 %v1951
    %2414 = vmatprep.subr.bf16.mxu0 %v1956
    %2415 = vmatpush1.bf16.msra.mxu0 %v1955
    %2416 = vmatprep.mubr.bf16.mxu0 %v780
    %2417 = vmatmul.mubr.bf16.gmra.mrb[0].mxu0 %v779
    %v2418 = vpop.f32.mrb[0].mxu0
    %v2419 = vadd.f32 %v2378, %v2418
    %v2420 = vpop.f32.mrb[0].mxu0
    %v2421 = vadd.f32 %v2380, %v2420
    %v2422 = vpop.f32.mrb[0].mxu0
    %v2423 = vpop.f32.mrb[0].mxu0
    %2424 = vdwg.mxu0
    %2425 = vmatprep.subr.bf16.mxu0 %v1960
    %2426 = vmatpush1.bf16.msra.mxu0 %v1959
    %2427 = vmatprep.subr.bf16.mxu0 %v1964
    %2428 = vmatpush1.bf16.msra.mxu0 %v1963
    %2429 = vmatprep.subr.bf16.mxu0 %v1968
    %2430 = vmatpush1.bf16.msra.mxu0 %v1967
    %2431 = vmatprep.subr.bf16.mxu0 %v1972
    %2432 = vmatpush1.bf16.msra.mxu0 %v1971
    %2433 = vmatprep.subr.bf16.mxu0 %v1976
    %2434 = vmatpush1.bf16.msra.mxu0 %v1975
    %2435 = vmatprep.subr.bf16.mxu0 %v1980
    %2436 = vmatpush1.bf16.msra.mxu0 %v1979
    %2437 = vmatprep.subr.bf16.mxu0 %v1984
    %2438 = vmatpush1.bf16.msra.mxu0 %v1983
    %2439 = vmatprep.subr.bf16.mxu0 %v1988
    %2440 = vmatpush1.bf16.msra.mxu0 %v1987
    %2441 = vmatprep.subr.bf16.mxu0 %v1992
    %2442 = vmatpush1.bf16.msra.mxu0 %v1991
    %2443 = vmatprep.subr.bf16.mxu0 %v1996
    %2444 = vmatpush1.bf16.msra.mxu0 %v1995
    %2445 = vmatprep.subr.bf16.mxu0 %v2000
    %2446 = vmatpush1.bf16.msra.mxu0 %v1999
    %2447 = vmatprep.subr.bf16.mxu0 %v2004
    %2448 = vmatpush1.bf16.msra.mxu0 %v2003
    %2449 = vmatprep.subr.bf16.mxu0 %v2008
    %2450 = vmatpush1.bf16.msra.mxu0 %v2007
    %2451 = vmatprep.subr.bf16.mxu0 %v2012
    %2452 = vmatpush1.bf16.msra.mxu0 %v2011
    %2453 = vmatprep.subr.bf16.mxu0 %v2016
    %2454 = vmatpush1.bf16.msra.mxu0 %v2015
    %2455 = vmatprep.subr.bf16.mxu0 %v2020
    %2456 = vmatpush1.bf16.msra.mxu0 %v2019
    %2457 = vmatprep.mubr.bf16.mxu0 %v782
    %2458 = vmatmul.mubr.bf16.gmra.mrb[0].mxu0 %v781
    %v2459 = vpop.f32.mrb[0].mxu0
    %v2460 = vadd.f32 %v2419, %v2459
    %v2461 = vpop.f32.mrb[0].mxu0
    %v2462 = vadd.f32 %v2421, %v2461
    %v2463 = vpop.f32.mrb[0].mxu0
    %v2464 = vpop.f32.mrb[0].mxu0
    %2465 = vdwg.mxu0
    %2466 = vmatprep.subr.bf16.mxu0 %v2024
    %2467 = vmatpush1.bf16.msra.mxu0 %v2023
    %2468 = vmatprep.subr.bf16.mxu0 %v2028
    %2469 = vmatpush1.bf16.msra.mxu0 %v2027
    %2470 = vmatprep.subr.bf16.mxu0 %v2032
    %2471 = vmatpush1.bf16.msra.mxu0 %v2031
    %2472 = vmatprep.subr.bf16.mxu0 %v2036
    %2473 = vmatpush1.bf16.msra.mxu0 %v2035
    %2474 = vmatprep.subr.bf16.mxu0 %v2040
    %2475 = vmatpush1.bf16.msra.mxu0 %v2039
    %2476 = vmatprep.subr.bf16.mxu0 %v2044
    %2477 = vmatpush1.bf16.msra.mxu0 %v2043
    %2478 = vmatprep.subr.bf16.mxu0 %v2048
    %2479 = vmatpush1.bf16.msra.mxu0 %v2047
    %2480 = vmatprep.subr.bf16.mxu0 %v2052
    %2481 = vmatpush1.bf16.msra.mxu0 %v2051
    %2482 = vmatprep.subr.bf16.mxu0 %v2056
    %2483 = vmatpush1.bf16.msra.mxu0 %v2055
    %2484 = vmatprep.subr.bf16.mxu0 %v2060
    %2485 = vmatpush1.bf16.msra.mxu0 %v2059
    %2486 = vmatprep.subr.bf16.mxu0 %v2064
    %2487 = vmatpush1.bf16.msra.mxu0 %v2063
    %2488 = vmatprep.subr.bf16.mxu0 %v2068
    %2489 = vmatpush1.bf16.msra.mxu0 %v2067
    %2490 = vmatprep.subr.bf16.mxu0 %v2072
    %2491 = vmatpush1.bf16.msra.mxu0 %v2071
    %2492 = vmatprep.subr.bf16.mxu0 %v2076
    %2493 = vmatpush1.bf16.msra.mxu0 %v2075
    %2494 = vmatprep.subr.bf16.mxu0 %v2080
    %2495 = vmatpush1.bf16.msra.mxu0 %v2079
    %2496 = vmatprep.subr.bf16.mxu0 %v2084
    %2497 = vmatpush1.bf16.msra.mxu0 %v2083
    %2498 = vmatprep.mubr.bf16.mxu0 %v784
    %2499 = vmatmul.mubr.bf16.gmra.mrb[0].mxu0 %v783
    %v2500 = vpop.f32.mrb[0].mxu0
    %v2501 = vadd.f32 %v2460, %v2500
    %v2502 = vpop.f32.mrb[0].mxu0
    %v2503 = vadd.f32 %v2462, %v2502
    %v2504 = vpop.f32.mrb[0].mxu0
    %v2505 = vpop.f32.mrb[0].mxu0
    %2506 = vdwg.mxu0
    %2507 = vmatprep.subr.bf16.mxu0 %v1834
    %2508 = vmatpush1.bf16.msra.mxu0 %v1833
    %2509 = vmatprep.subr.bf16.mxu0 %v1838
    %2510 = vmatpush1.bf16.msra.mxu0 %v1837
    %2511 = vmatprep.subr.bf16.mxu0 %v1842
    %2512 = vmatpush1.bf16.msra.mxu0 %v1841
    %2513 = vmatprep.subr.bf16.mxu0 %v1846
    %2514 = vmatpush1.bf16.msra.mxu0 %v1845
    %2515 = vmatprep.subr.bf16.mxu0 %v1850
    %2516 = vmatpush1.bf16.msra.mxu0 %v1849
    %2517 = vmatprep.subr.bf16.mxu0 %v1854
    %2518 = vmatpush1.bf16.msra.mxu0 %v1853
    %2519 = vmatprep.subr.bf16.mxu0 %v1858
    %2520 = vmatpush1.bf16.msra.mxu0 %v1857
    %2521 = vmatprep.subr.bf16.mxu0 %v1862
    %2522 = vmatpush1.bf16.msra.mxu0 %v1861
    %2523 = vmatprep.subr.bf16.mxu0 %v1866
    %2524 = vmatpush1.bf16.msra.mxu0 %v1865
    %2525 = vmatprep.subr.bf16.mxu0 %v1870
    %2526 = vmatpush1.bf16.msra.mxu0 %v1869
    %2527 = vmatprep.subr.bf16.mxu0 %v1874
    %2528 = vmatpush1.bf16.msra.mxu0 %v1873
    %2529 = vmatprep.subr.bf16.mxu0 %v1878
    %2530 = vmatpush1.bf16.msra.mxu0 %v1877
    %2531 = vmatprep.subr.bf16.mxu0 %v1882
    %2532 = vmatpush1.bf16.msra.mxu0 %v1881
    %2533 = vmatprep.subr.bf16.mxu0 %v1886
    %2534 = vmatpush1.bf16.msra.mxu0 %v1885
    %2535 = vmatprep.subr.bf16.mxu0 %v1890
    %2536 = vmatpush1.bf16.msra.mxu0 %v1889
    %2537 = vmatprep.subr.bf16.mxu0 %v1894
    %2538 = vmatpush1.bf16.msra.mxu0 %v1893
    %2539 = vmatprep.mubr.bf16.mxu0 %v778
    %2540 = vmatmul.mubr.bf16.gmra.mrb[0].mxu0 %v777
    %v2541 = vpop.f32.mrb[0].mxu0
    %v2542 = vadd.f32 %v1054, %v2541
    %v2543 = vpop.f32.mrb[0].mxu0
    %v2544 = vadd.f32 %v1058, %v2543
    %v2545 = vpop.f32.mrb[0].mxu0
    %v2546 = vpop.f32.mrb[0].mxu0
    %2547 = vdwg.mxu0
    %2548 = vmatprep.subr.bf16.mxu0 %v1898
    %2549 = vmatpush1.bf16.msra.mxu0 %v1897
    %2550 = vmatprep.subr.bf16.mxu0 %v1902
    %2551 = vmatpush1.bf16.msra.mxu0 %v1901
    %2552 = vmatprep.subr.bf16.mxu0 %v1906
    %2553 = vmatpush1.bf16.msra.mxu0 %v1905
    %2554 = vmatprep.subr.bf16.mxu0 %v1910
    %2555 = vmatpush1.bf16.msra.mxu0 %v1909
    %2556 = vmatprep.subr.bf16.mxu0 %v1914
    %2557 = vmatpush1.bf16.msra.mxu0 %v1913
    %2558 = vmatprep.subr.bf16.mxu0 %v1918
    %2559 = vmatpush1.bf16.msra.mxu0 %v1917
    %2560 = vmatprep.subr.bf16.mxu0 %v1922
    %2561 = vmatpush1.bf16.msra.mxu0 %v1921
    %2562 = vmatprep.subr.bf16.mxu0 %v1926
    %2563 = vmatpush1.bf16.msra.mxu0 %v1925
    %2564 = vmatprep.subr.bf16.mxu0 %v1930
    %2565 = vmatpush1.bf16.msra.mxu0 %v1929
    %2566 = vmatprep.subr.bf16.mxu0 %v1934
    %2567 = vmatpush1.bf16.msra.mxu0 %v1933
    %2568 = vmatprep.subr.bf16.mxu0 %v1938
    %2569 = vmatpush1.bf16.msra.mxu0 %v1937
    %2570 = vmatprep.subr.bf16.mxu0 %v1942
    %2571 = vmatpush1.bf16.msra.mxu0 %v1941
    %2572 = vmatprep.subr.bf16.mxu0 %v1946
    %2573 = vmatpush1.bf16.msra.mxu0 %v1945
    %2574 = vmatprep.subr.bf16.mxu0 %v1950
    %2575 = vmatpush1.bf16.msra.mxu0 %v1949
    %2576 = vmatprep.subr.bf16.mxu0 %v1954
    %2577 = vmatpush1.bf16.msra.mxu0 %v1953
    %2578 = vmatprep.subr.bf16.mxu0 %v1958
    %2579 = vmatpush1.bf16.msra.mxu0 %v1957
    %2580 = vmatprep.mubr.bf16.mxu0 %v780
    %2581 = vmatmul.mubr.bf16.gmra.mrb[0].mxu0 %v779
    %v2582 = vpop.f32.mrb[0].mxu0
    %v2583 = vadd.f32 %v2542, %v2582
    %v2584 = vpop.f32.mrb[0].mxu0
    %v2585 = vadd.f32 %v2544, %v2584
    %v2586 = vpop.f32.mrb[0].mxu0
    %v2587 = vpop.f32.mrb[0].mxu0
    %2588 = vdwg.mxu0
    %2589 = vmatprep.subr.bf16.mxu0 %v1962
    %2590 = vmatpush1.bf16.msra.mxu0 %v1961
    %2591 = vmatprep.subr.bf16.mxu0 %v1966
    %2592 = vmatpush1.bf16.msra.mxu0 %v1965
    %2593 = vmatprep.subr.bf16.mxu0 %v1970
    %2594 = vmatpush1.bf16.msra.mxu0 %v1969
    %2595 = vmatprep.subr.bf16.mxu0 %v1974
    %2596 = vmatpush1.bf16.msra.mxu0 %v1973
    %2597 = vmatprep.subr.bf16.mxu0 %v1978
    %2598 = vmatpush1.bf16.msra.mxu0 %v1977
    %2599 = vmatprep.subr.bf16.mxu0 %v1982
    %2600 = vmatpush1.bf16.msra.mxu0 %v1981
    %2601 = vmatprep.subr.bf16.mxu0 %v1986
    %2602 = vmatpush1.bf16.msra.mxu0 %v1985
    %2603 = vmatprep.subr.bf16.mxu0 %v1990
    %2604 = vmatpush1.bf16.msra.mxu0 %v1989
    %2605 = vmatprep.subr.bf16.mxu0 %v1994
    %2606 = vmatpush1.bf16.msra.mxu0 %v1993
    %2607 = vmatprep.subr.bf16.mxu0 %v1998
    %2608 = vmatpush1.bf16.msra.mxu0 %v1997
    %2609 = vmatprep.subr.bf16.mxu0 %v2002
    %2610 = vmatpush1.bf16.msra.mxu0 %v2001
    %2611 = vmatprep.subr.bf16.mxu0 %v2006
    %2612 = vmatpush1.bf16.msra.mxu0 %v2005
    %2613 = vmatprep.subr.bf16.mxu0 %v2010
    %2614 = vmatpush1.bf16.msra.mxu0 %v2009
    %2615 = vmatprep.subr.bf16.mxu0 %v2014
    %2616 = vmatpush1.bf16.msra.mxu0 %v2013
    %2617 = vmatprep.subr.bf16.mxu0 %v2018
    %2618 = vmatpush1.bf16.msra.mxu0 %v2017
    %2619 = vmatprep.subr.bf16.mxu0 %v2022
    %2620 = vmatpush1.bf16.msra.mxu0 %v2021
    %2621 = vmatprep.mubr.bf16.mxu0 %v782
    %2622 = vmatmul.mubr.bf16.gmra.mrb[0].mxu0 %v781
    %v2623 = vpop.f32.mrb[0].mxu0
    %v2624 = vadd.f32 %v2583, %v2623
    %v2625 = vpop.f32.mrb[0].mxu0
    %v2626 = vadd.f32 %v2585, %v2625
    %v2627 = vpop.f32.mrb[0].mxu0
    %v2628 = vpop.f32.mrb[0].mxu0
    %2629 = vdwg.mxu0
    %2630 = vmatprep.subr.bf16.mxu0 %v2026
    %2631 = vmatpush1.bf16.msra.mxu0 %v2025
    %2632 = vmatprep.subr.bf16.mxu0 %v2030
    %2633 = vmatpush1.bf16.msra.mxu0 %v2029
    %2634 = vmatprep.subr.bf16.mxu0 %v2034
    %2635 = vmatpush1.bf16.msra.mxu0 %v2033
    %2636 = vmatprep.subr.bf16.mxu0 %v2038
    %2637 = vmatpush1.bf16.msra.mxu0 %v2037
    %2638 = vmatprep.subr.bf16.mxu0 %v2042
    %2639 = vmatpush1.bf16.msra.mxu0 %v2041
    %2640 = vmatprep.subr.bf16.mxu0 %v2046
    %2641 = vmatpush1.bf16.msra.mxu0 %v2045
    %2642 = vmatprep.subr.bf16.mxu0 %v2050
    %2643 = vmatpush1.bf16.msra.mxu0 %v2049
    %2644 = vmatprep.subr.bf16.mxu0 %v2054
    %2645 = vmatpush1.bf16.msra.mxu0 %v2053
    %2646 = vmatprep.subr.bf16.mxu0 %v2058
    %2647 = vmatpush1.bf16.msra.mxu0 %v2057
    %2648 = vmatprep.subr.bf16.mxu0 %v2062
    %2649 = vmatpush1.bf16.msra.mxu0 %v2061
    %2650 = vmatprep.subr.bf16.mxu0 %v2066
    %2651 = vmatpush1.bf16.msra.mxu0 %v2065
    %2652 = vmatprep.subr.bf16.mxu0 %v2070
    %2653 = vmatpush1.bf16.msra.mxu0 %v2069
    %2654 = vmatprep.subr.bf16.mxu0 %v2074
    %2655 = vmatpush1.bf16.msra.mxu0 %v2073
    %2656 = vmatprep.subr.bf16.mxu0 %v2078
    %2657 = vmatpush1.bf16.msra.mxu0 %v2077
    %2658 = vmatprep.subr.bf16.mxu0 %v2082
    %2659 = vmatpush1.bf16.msra.mxu0 %v2081
    %2660 = vmatprep.subr.bf16.mxu0 %v2086
    %2661 = vmatpush1.bf16.msra.mxu0 %v2085
    %2662 = vmatprep.mubr.bf16.mxu0 %v784
    %2663 = vmatmul.mubr.bf16.gmra.mrb[0].mxu0 %v783
    %v2664 = vpop.f32.mrb[0].mxu0
    %v2665 = vadd.f32 %v2624, %v2664
    %v2666 = vpop.f32.mrb[0].mxu0
    %v2667 = vadd.f32 %v2626, %v2666
    %v2668 = vpop.f32.mrb[0].mxu0
    %v2669 = vpop.f32.mrb[0].mxu0
    %2670 = vdwg.mxu0
    %v2671 = vmax.f32 %v2501, 0.0
    %v2672 = vmax.f32 %v2503, 0.0
    %v2673 = vmax.f32 %v2665, 0.0
    %v2674 = vmax.f32 %v2667, 0.0
    %v2675 = vpack.c.bf16 %v2671, %v2671
    %v2676 = vpack.c.bf16 %v2672, %v2672
    %v2677 = vpack.c.bf16 %v2673, %v2673
    %v2678 = vpack.c.bf16 %v2674, %v2674
    %v2679 = vld [vmem:[#allocation11] sm:$0xff]
    %v2680 = vld [vmem:[#allocation11 + $0x8] sm:$0xff]
    %v2681 = vld [vmem:[#allocation11 + $0x10] sm:$0xff]
    %v2682 = vld [vmem:[#allocation11 + $0x18] sm:$0xff]
    %v2683 = vld [vmem:[#allocation11 + $0x20] sm:$0xff]
    %v2684 = vld [vmem:[#allocation11 + $0x28] sm:$0xff]
    %v2685 = vld [vmem:[#allocation11 + $0x30] sm:$0xff]
    %v2686 = vld [vmem:[#allocation11 + $0x38] sm:$0xff]
    %v2687 = vld [vmem:[#allocation11 + $0x40] sm:$0xff]
    %v2688 = vld [vmem:[#allocation11 + $0x48] sm:$0xff]
    %v2689 = vld [vmem:[#allocation11 + $0x50] sm:$0xff]
    %v2690 = vld [vmem:[#allocation11 + $0x58] sm:$0xff]
    %v2691 = vld [vmem:[#allocation11 + $0x60] sm:$0xff]
    %v2692 = vld [vmem:[#allocation11 + $0x68] sm:$0xff]
    %v2693 = vld [vmem:[#allocation11 + $0x70] sm:$0xff]
    %v2694 = vld [vmem:[#allocation11 + $0x78] sm:$0xff]
    %v2695 = vld [vmem:[#allocation11 + $0x80] sm:$0xff]
    %v2696 = vld [vmem:[#allocation11 + $0x88] sm:$0xff]
    %v2697 = vld [vmem:[#allocation11 + $0x90] sm:$0xff]
    %v2698 = vld [vmem:[#allocation11 + $0x98] sm:$0xff]
    %v2699 = vld [vmem:[#allocation11 + $0xa0] sm:$0xff]
    %v2700 = vld [vmem:[#allocation11 + $0xa8] sm:$0xff]
    %v2701 = vld [vmem:[#allocation11 + $0xb0] sm:$0xff]
    %v2702 = vld [vmem:[#allocation11 + $0xb8] sm:$0xff]
    %v2703 = vld [vmem:[#allocation11 + $0xc0] sm:$0xff]
    %v2704 = vld [vmem:[#allocation11 + $0xc8] sm:$0xff]
    %v2705 = vld [vmem:[#allocation11 + $0xd0] sm:$0xff]
    %v2706 = vld [vmem:[#allocation11 + $0xd8] sm:$0xff]
    %v2707 = vld [vmem:[#allocation11 + $0xe0] sm:$0xff]
    %v2708 = vld [vmem:[#allocation11 + $0xe8] sm:$0xff]
    %v2709 = vld [vmem:[#allocation11 + $0xf0] sm:$0xff]
    %v2710 = vld [vmem:[#allocation11 + $0xf8] sm:$0xff]
    %v2711 = vld [vmem:[#allocation11 + $0x100] sm:$0xff]
    %v2712 = vld [vmem:[#allocation11 + $0x108] sm:$0xff]
    %v2713 = vld [vmem:[#allocation11 + $0x110] sm:$0xff]
    %v2714 = vld [vmem:[#allocation11 + $0x118] sm:$0xff]
    %v2715 = vld [vmem:[#allocation11 + $0x120] sm:$0xff]
    %v2716 = vld [vmem:[#allocation11 + $0x128] sm:$0xff]
    %v2717 = vld [vmem:[#allocation11 + $0x130] sm:$0xff]
    %v2718 = vld [vmem:[#allocation11 + $0x138] sm:$0xff]
    %v2719 = vld [vmem:[#allocation11 + $0x140] sm:$0xff]
    %v2720 = vld [vmem:[#allocation11 + $0x148] sm:$0xff]
    %v2721 = vld [vmem:[#allocation11 + $0x150] sm:$0xff]
    %v2722 = vld [vmem:[#allocation11 + $0x158] sm:$0xff]
    %v2723 = vld [vmem:[#allocation11 + $0x160] sm:$0xff]
    %v2724 = vld [vmem:[#allocation11 + $0x168] sm:$0xff]
    %v2725 = vld [vmem:[#allocation11 + $0x170] sm:$0xff]
    %v2726 = vld [vmem:[#allocation11 + $0x178] sm:$0xff]
    %v2727 = vld [vmem:[#allocation11 + $0x180] sm:$0xff]
    %v2728 = vld [vmem:[#allocation11 + $0x188] sm:$0xff]
    %v2729 = vld [vmem:[#allocation11 + $0x190] sm:$0xff]
    %v2730 = vld [vmem:[#allocation11 + $0x198] sm:$0xff]
    %v2731 = vld [vmem:[#allocation11 + $0x1a0] sm:$0xff]
    %v2732 = vld [vmem:[#allocation11 + $0x1a8] sm:$0xff]
    %v2733 = vld [vmem:[#allocation11 + $0x1b0] sm:$0xff]
    %v2734 = vld [vmem:[#allocation11 + $0x1b8] sm:$0xff]
    %v2735 = vld [vmem:[#allocation11 + $0x1c0] sm:$0xff]
    %v2736 = vld [vmem:[#allocation11 + $0x1c8] sm:$0xff]
    %v2737 = vld [vmem:[#allocation11 + $0x1d0] sm:$0xff]
    %v2738 = vld [vmem:[#allocation11 + $0x1d8] sm:$0xff]
    %v2739 = vld [vmem:[#allocation11 + $0x1e0] sm:$0xff]
    %v2740 = vld [vmem:[#allocation11 + $0x1e8] sm:$0xff]
    %v2741 = vld [vmem:[#allocation11 + $0x1f0] sm:$0xff]
    %v2742 = vld [vmem:[#allocation11 + $0x1f8] sm:$0xff]
    %v2743 = vld [vmem:[#allocation13] sm:$0x3]
    %v2745 = vlaneseq
    %v2746 = vshrl.u32 %v2745, 7
    %v2747 = vsub.s32 0, %v2746
    %v2748 = vrot.slane %v2743, %v2747
    %v2749 = vlaneseq
    %v2750 = vshrl.u32 %v2749, 7
    %v2751 = vsub.s32 1, %v2750
    %v2752 = vrot.slane %v2743, %v2751
    %v2819 = vunpack.c.l.b16 %v2679
    %v2820 = vunpack.c.h.b16 %v2679
    %v2821 = vunpack.c.l.b16 %v2680
    %v2822 = vunpack.c.h.b16 %v2680
    %v2823 = vunpack.c.l.b16 %v2681
    %v2824 = vunpack.c.h.b16 %v2681
    %v2825 = vunpack.c.l.b16 %v2682
    %v2826 = vunpack.c.h.b16 %v2682
    %v2827 = vunpack.c.l.b16 %v2683
    %v2828 = vunpack.c.h.b16 %v2683
    %v2829 = vunpack.c.l.b16 %v2684
    %v2830 = vunpack.c.h.b16 %v2684
    %v2831 = vunpack.c.l.b16 %v2685
    %v2832 = vunpack.c.h.b16 %v2685
    %v2833 = vunpack.c.l.b16 %v2686
    %v2834 = vunpack.c.h.b16 %v2686
    %v2835 = vunpack.c.l.b16 %v2687
    %v2836 = vunpack.c.h.b16 %v2687
    %v2837 = vunpack.c.l.b16 %v2688
    %v2838 = vunpack.c.h.b16 %v2688
    %v2839 = vunpack.c.l.b16 %v2689
    %v2840 = vunpack.c.h.b16 %v2689
    %v2841 = vunpack.c.l.b16 %v2690
    %v2842 = vunpack.c.h.b16 %v2690
    %v2843 = vunpack.c.l.b16 %v2691
    %v2844 = vunpack.c.h.b16 %v2691
    %v2845 = vunpack.c.l.b16 %v2692
    %v2846 = vunpack.c.h.b16 %v2692
    %v2847 = vunpack.c.l.b16 %v2693
    %v2848 = vunpack.c.h.b16 %v2693
    %v2849 = vunpack.c.l.b16 %v2694
    %v2850 = vunpack.c.h.b16 %v2694
    %v2851 = vunpack.c.l.b16 %v2695
    %v2852 = vunpack.c.h.b16 %v2695
    %v2853 = vunpack.c.l.b16 %v2696
    %v2854 = vunpack.c.h.b16 %v2696
    %v2855 = vunpack.c.l.b16 %v2697
    %v2856 = vunpack.c.h.b16 %v2697
    %v2857 = vunpack.c.l.b16 %v2698
    %v2858 = vunpack.c.h.b16 %v2698
    %v2859 = vunpack.c.l.b16 %v2699
    %v2860 = vunpack.c.h.b16 %v2699
    %v2861 = vunpack.c.l.b16 %v2700
    %v2862 = vunpack.c.h.b16 %v2700
    %v2863 = vunpack.c.l.b16 %v2701
    %v2864 = vunpack.c.h.b16 %v2701
    %v2865 = vunpack.c.l.b16 %v2702
    %v2866 = vunpack.c.h.b16 %v2702
    %v2867 = vunpack.c.l.b16 %v2703
    %v2868 = vunpack.c.h.b16 %v2703
    %v2869 = vunpack.c.l.b16 %v2704
    %v2870 = vunpack.c.h.b16 %v2704
    %v2871 = vunpack.c.l.b16 %v2705
    %v2872 = vunpack.c.h.b16 %v2705
    %v2873 = vunpack.c.l.b16 %v2706
    %v2874 = vunpack.c.h.b16 %v2706
    %v2875 = vunpack.c.l.b16 %v2707
    %v2876 = vunpack.c.h.b16 %v2707
    %v2877 = vunpack.c.l.b16 %v2708
    %v2878 = vunpack.c.h.b16 %v2708
    %v2879 = vunpack.c.l.b16 %v2709
    %v2880 = vunpack.c.h.b16 %v2709
    %v2881 = vunpack.c.l.b16 %v2710
    %v2882 = vunpack.c.h.b16 %v2710
    %v2883 = vunpack.c.l.b16 %v2711
    %v2884 = vunpack.c.h.b16 %v2711
    %v2885 = vunpack.c.l.b16 %v2712
    %v2886 = vunpack.c.h.b16 %v2712
    %v2887 = vunpack.c.l.b16 %v2713
    %v2888 = vunpack.c.h.b16 %v2713
    %v2889 = vunpack.c.l.b16 %v2714
    %v2890 = vunpack.c.h.b16 %v2714
    %v2891 = vunpack.c.l.b16 %v2715
    %v2892 = vunpack.c.h.b16 %v2715
    %v2893 = vunpack.c.l.b16 %v2716
    %v2894 = vunpack.c.h.b16 %v2716
    %v2895 = vunpack.c.l.b16 %v2717
    %v2896 = vunpack.c.h.b16 %v2717
    %v2897 = vunpack.c.l.b16 %v2718
    %v2898 = vunpack.c.h.b16 %v2718
    %v2899 = vunpack.c.l.b16 %v2719
    %v2900 = vunpack.c.h.b16 %v2719
    %v2901 = vunpack.c.l.b16 %v2720
    %v2902 = vunpack.c.h.b16 %v2720
    %v2903 = vunpack.c.l.b16 %v2721
    %v2904 = vunpack.c.h.b16 %v2721
    %v2905 = vunpack.c.l.b16 %v2722
    %v2906 = vunpack.c.h.b16 %v2722
    %v2907 = vunpack.c.l.b16 %v2723
    %v2908 = vunpack.c.h.b16 %v2723
    %v2909 = vunpack.c.l.b16 %v2724
    %v2910 = vunpack.c.h.b16 %v2724
    %v2911 = vunpack.c.l.b16 %v2725
    %v2912 = vunpack.c.h.b16 %v2725
    %v2913 = vunpack.c.l.b16 %v2726
    %v2914 = vunpack.c.h.b16 %v2726
    %v2915 = vunpack.c.l.b16 %v2727
    %v2916 = vunpack.c.h.b16 %v2727
    %v2917 = vunpack.c.l.b16 %v2728
    %v2918 = vunpack.c.h.b16 %v2728
    %v2919 = vunpack.c.l.b16 %v2729
    %v2920 = vunpack.c.h.b16 %v2729
    %v2921 = vunpack.c.l.b16 %v2730
    %v2922 = vunpack.c.h.b16 %v2730
    %v2923 = vunpack.c.l.b16 %v2731
    %v2924 = vunpack.c.h.b16 %v2731
    %v2925 = vunpack.c.l.b16 %v2732
    %v2926 = vunpack.c.h.b16 %v2732
    %v2927 = vunpack.c.l.b16 %v2733
    %v2928 = vunpack.c.h.b16 %v2733
    %v2929 = vunpack.c.l.b16 %v2734
    %v2930 = vunpack.c.h.b16 %v2734
    %v2931 = vunpack.c.l.b16 %v2735
    %v2932 = vunpack.c.h.b16 %v2735
    %v2933 = vunpack.c.l.b16 %v2736
    %v2934 = vunpack.c.h.b16 %v2736
    %v2935 = vunpack.c.l.b16 %v2737
    %v2936 = vunpack.c.h.b16 %v2737
    %v2937 = vunpack.c.l.b16 %v2738
    %v2938 = vunpack.c.h.b16 %v2738
    %v2939 = vunpack.c.l.b16 %v2739
    %v2940 = vunpack.c.h.b16 %v2739
    %v2941 = vunpack.c.l.b16 %v2740
    %v2942 = vunpack.c.h.b16 %v2740
    %v2943 = vunpack.c.l.b16 %v2741
    %v2944 = vunpack.c.h.b16 %v2741
    %v2945 = vunpack.c.l.b16 %v2742
    %v2946 = vunpack.c.h.b16 %v2742
    %v2947 = vpack.c.b16 %v2821, %v2819
    %v2948 = vpack.c.b16 %v2822, %v2820
    %v2949 = vpack.c.b16 %v2825, %v2823
    %v2950 = vpack.c.b16 %v2826, %v2824
    %v2951 = vpack.c.b16 %v2829, %v2827
    %v2952 = vpack.c.b16 %v2830, %v2828
    %v2953 = vpack.c.b16 %v2833, %v2831
    %v2954 = vpack.c.b16 %v2834, %v2832
    %v2955 = vpack.c.b16 %v2837, %v2835
    %v2956 = vpack.c.b16 %v2838, %v2836
    %v2957 = vpack.c.b16 %v2841, %v2839
    %v2958 = vpack.c.b16 %v2842, %v2840
    %v2959 = vpack.c.b16 %v2845, %v2843
    %v2960 = vpack.c.b16 %v2846, %v2844
    %v2961 = vpack.c.b16 %v2849, %v2847
    %v2962 = vpack.c.b16 %v2850, %v2848
    %v2963 = vpack.c.b16 %v2853, %v2851
    %v2964 = vpack.c.b16 %v2854, %v2852
    %v2965 = vpack.c.b16 %v2857, %v2855
    %v2966 = vpack.c.b16 %v2858, %v2856
    %v2967 = vpack.c.b16 %v2861, %v2859
    %v2968 = vpack.c.b16 %v2862, %v2860
    %v2969 = vpack.c.b16 %v2865, %v2863
    %v2970 = vpack.c.b16 %v2866, %v2864
    %v2971 = vpack.c.b16 %v2869, %v2867
    %v2972 = vpack.c.b16 %v2870, %v2868
    %v2973 = vpack.c.b16 %v2873, %v2871
    %v2974 = vpack.c.b16 %v2874, %v2872
    %v2975 = vpack.c.b16 %v2877, %v2875
    %v2976 = vpack.c.b16 %v2878, %v2876
    %v2977 = vpack.c.b16 %v2881, %v2879
    %v2978 = vpack.c.b16 %v2882, %v2880
    %v2979 = vpack.c.b16 %v2885, %v2883
    %v2980 = vpack.c.b16 %v2886, %v2884
    %v2981 = vpack.c.b16 %v2889, %v2887
    %v2982 = vpack.c.b16 %v2890, %v2888
    %v2983 = vpack.c.b16 %v2893, %v2891
    %v2984 = vpack.c.b16 %v2894, %v2892
    %v2985 = vpack.c.b16 %v2897, %v2895
    %v2986 = vpack.c.b16 %v2898, %v2896
    %v2987 = vpack.c.b16 %v2901, %v2899
    %v2988 = vpack.c.b16 %v2902, %v2900
    %v2989 = vpack.c.b16 %v2905, %v2903
    %v2990 = vpack.c.b16 %v2906, %v2904
    %v2991 = vpack.c.b16 %v2909, %v2907
    %v2992 = vpack.c.b16 %v2910, %v2908
    %v2993 = vpack.c.b16 %v2913, %v2911
    %v2994 = vpack.c.b16 %v2914, %v2912
    %v2995 = vpack.c.b16 %v2917, %v2915
    %v2996 = vpack.c.b16 %v2918, %v2916
    %v2997 = vpack.c.b16 %v2921, %v2919
    %v2998 = vpack.c.b16 %v2922, %v2920
    %v2999 = vpack.c.b16 %v2925, %v2923
    %v3000 = vpack.c.b16 %v2926, %v2924
    %v3001 = vpack.c.b16 %v2929, %v2927
    %v3002 = vpack.c.b16 %v2930, %v2928
    %v3003 = vpack.c.b16 %v2933, %v2931
    %v3004 = vpack.c.b16 %v2934, %v2932
    %v3005 = vpack.c.b16 %v2937, %v2935
    %v3006 = vpack.c.b16 %v2938, %v2936
    %v3007 = vpack.c.b16 %v2941, %v2939
    %v3008 = vpack.c.b16 %v2942, %v2940
    %v3009 = vpack.c.b16 %v2945, %v2943
    %v3010 = vpack.c.b16 %v2946, %v2944
    %3075 = vmatprep.subr.bf16.mxu0 %v2948
    %3076 = vmatpush1.bf16.msra.mxu0 %v2947
    %3077 = vmatprep.subr.bf16.mxu0 %v2950
    %3078 = vmatpush1.bf16.msra.mxu0 %v2949
    %3079 = vmatprep.subr.bf16.mxu0 %v2952
    %3080 = vmatpush1.bf16.msra.mxu0 %v2951
    %3081 = vmatprep.subr.bf16.mxu0 %v2954
    %3082 = vmatpush1.bf16.msra.mxu0 %v2953
    %3083 = vmatprep.subr.bf16.mxu0 %v2956
    %3084 = vmatpush1.bf16.msra.mxu0 %v2955
    %3085 = vmatprep.subr.bf16.mxu0 %v2958
    %3086 = vmatpush1.bf16.msra.mxu0 %v2957
    %3087 = vmatprep.subr.bf16.mxu0 %v2960
    %3088 = vmatpush1.bf16.msra.mxu0 %v2959
    %3089 = vmatprep.subr.bf16.mxu0 %v2962
    %3090 = vmatpush1.bf16.msra.mxu0 %v2961
    %3091 = vmatprep.subr.bf16.mxu0 %v2964
    %3092 = vmatpush1.bf16.msra.mxu0 %v2963
    %3093 = vmatprep.subr.bf16.mxu0 %v2966
    %3094 = vmatpush1.bf16.msra.mxu0 %v2965
    %3095 = vmatprep.subr.bf16.mxu0 %v2968
    %3096 = vmatpush1.bf16.msra.mxu0 %v2967
    %3097 = vmatprep.subr.bf16.mxu0 %v2970
    %3098 = vmatpush1.bf16.msra.mxu0 %v2969
    %3099 = vmatprep.subr.bf16.mxu0 %v2972
    %3100 = vmatpush1.bf16.msra.mxu0 %v2971
    %3101 = vmatprep.subr.bf16.mxu0 %v2974
    %3102 = vmatpush1.bf16.msra.mxu0 %v2973
    %3103 = vmatprep.subr.bf16.mxu0 %v2976
    %3104 = vmatpush1.bf16.msra.mxu0 %v2975
    %3105 = vmatprep.subr.bf16.mxu0 %v2978
    %3106 = vmatpush1.bf16.msra.mxu0 %v2977
    %3107 = vmatprep.mubr.bf16.mxu0 %v2676
    %3108 = vmatmul.mubr.bf16.gmra.mrb[0].mxu0 %v2675
    %v3109 = vpop.f32.mrb[0].mxu0
    %v3110 = vadd.f32 %v2748, %v3109
    %v3111 = vpop.f32.mrb[0].mxu0
    %v3112 = vadd.f32 %v2752, %v3111
    %v3113 = vpop.f32.mrb[0].mxu0
    %v3114 = vpop.f32.mrb[0].mxu0
    %3115 = vdwg.mxu0
    %3116 = vmatprep.subr.bf16.mxu0 %v2980
    %3117 = vmatpush1.bf16.msra.mxu0 %v2979
    %3118 = vmatprep.subr.bf16.mxu0 %v2982
    %3119 = vmatpush1.bf16.msra.mxu0 %v2981
    %3120 = vmatprep.subr.bf16.mxu0 %v2984
    %3121 = vmatpush1.bf16.msra.mxu0 %v2983
    %3122 = vmatprep.subr.bf16.mxu0 %v2986
    %3123 = vmatpush1.bf16.msra.mxu0 %v2985
    %3124 = vmatprep.subr.bf16.mxu0 %v2988
    %3125 = vmatpush1.bf16.msra.mxu0 %v2987
    %3126 = vmatprep.subr.bf16.mxu0 %v2990
    %3127 = vmatpush1.bf16.msra.mxu0 %v2989
    %3128 = vmatprep.subr.bf16.mxu0 %v2992
    %3129 = vmatpush1.bf16.msra.mxu0 %v2991
    %3130 = vmatprep.subr.bf16.mxu0 %v2994
    %3131 = vmatpush1.bf16.msra.mxu0 %v2993
    %3132 = vmatprep.subr.bf16.mxu0 %v2996
    %3133 = vmatpush1.bf16.msra.mxu0 %v2995
    %3134 = vmatprep.subr.bf16.mxu0 %v2998
    %3135 = vmatpush1.bf16.msra.mxu0 %v2997
    %3136 = vmatprep.subr.bf16.mxu0 %v3000
    %3137 = vmatpush1.bf16.msra.mxu0 %v2999
    %3138 = vmatprep.subr.bf16.mxu0 %v3002
    %3139 = vmatpush1.bf16.msra.mxu0 %v3001
    %3140 = vmatprep.subr.bf16.mxu0 %v3004
    %3141 = vmatpush1.bf16.msra.mxu0 %v3003
    %3142 = vmatprep.subr.bf16.mxu0 %v3006
    %3143 = vmatpush1.bf16.msra.mxu0 %v3005
    %3144 = vmatprep.subr.bf16.mxu0 %v3008
    %3145 = vmatpush1.bf16.msra.mxu0 %v3007
    %3146 = vmatprep.subr.bf16.mxu0 %v3010
    %3147 = vmatpush1.bf16.msra.mxu0 %v3009
    %3148 = vmatprep.mubr.bf16.mxu0 %v2678
    %3149 = vmatmul.mubr.bf16.gmra.mrb[0].mxu0 %v2677
    %v3150 = vpop.f32.mrb[0].mxu0
    %v3151 = vadd.f32 %v3110, %v3150
    %v3152 = vpop.f32.mrb[0].mxu0
    %v3153 = vadd.f32 %v3112, %v3152
    %v3154 = vpop.f32.mrb[0].mxu0
    %v3155 = vpop.f32.mrb[0].mxu0
    %3156 = vdwg.mxu0
    %v3157 = vmax.f32 %v3151, 0.0
    %v3158 = vmax.f32 %v3153, 0.0
    %v3159 = vpack.c.bf16 %v3157, %v3157
    %v3160 = vpack.c.bf16 %v3158, %v3158
    %v3161 = vld [vmem:[#allocation14] sm:$0xf]
    %v3162 = vld [vmem:[#allocation14 + $0x4] sm:$0xf]
    %v3163 = vld [vmem:[#allocation14 + $0x8] sm:$0xf]
    %v3164 = vld [vmem:[#allocation14 + $0xc] sm:$0xf]
    %v3165 = vld [vmem:[#allocation14 + $0x10] sm:$0xf]
    %v3166 = vld [vmem:[#allocation14 + $0x14] sm:$0xf]
    %v3167 = vld [vmem:[#allocation14 + $0x18] sm:$0xf]
    %v3168 = vld [vmem:[#allocation14 + $0x1c] sm:$0xf]
    %v3169 = vld [vmem:[#allocation14 + $0x20] sm:$0xf]
    %v3170 = vld [vmem:[#allocation14 + $0x24] sm:$0xf]
    %v3171 = vld [vmem:[#allocation14 + $0x28] sm:$0xf]
    %v3172 = vld [vmem:[#allocation14 + $0x2c] sm:$0xf]
    %v3173 = vld [vmem:[#allocation14 + $0x30] sm:$0xf]
    %v3174 = vld [vmem:[#allocation14 + $0x34] sm:$0xf]
    %v3175 = vld [vmem:[#allocation14 + $0x38] sm:$0xf]
    %v3176 = vld [vmem:[#allocation14 + $0x3c] sm:$0xf]
    %v3177 = vld [vmem:[#allocation14 + $0x40] sm:$0xf]
    %v3178 = vld [vmem:[#allocation14 + $0x44] sm:$0xf]
    %v3179 = vld [vmem:[#allocation14 + $0x48] sm:$0xf]
    %v3180 = vld [vmem:[#allocation14 + $0x4c] sm:$0xf]
    %v3181 = vld [vmem:[#allocation14 + $0x50] sm:$0xf]
    %v3182 = vld [vmem:[#allocation14 + $0x54] sm:$0xf]
    %v3183 = vld [vmem:[#allocation14 + $0x58] sm:$0xf]
    %v3184 = vld [vmem:[#allocation14 + $0x5c] sm:$0xf]
    %v3185 = vld [vmem:[#allocation14 + $0x60] sm:$0xf]
    %v3186 = vld [vmem:[#allocation14 + $0x64] sm:$0xf]
    %v3187 = vld [vmem:[#allocation14 + $0x68] sm:$0xf]
    %v3188 = vld [vmem:[#allocation14 + $0x6c] sm:$0xf]
    %v3189 = vld [vmem:[#allocation14 + $0x70] sm:$0xf]
    %v3190 = vld [vmem:[#allocation14 + $0x74] sm:$0xf]
    %v3191 = vld [vmem:[#allocation14 + $0x78] sm:$0xf]
    %v3192 = vld [vmem:[#allocation14 + $0x7c] sm:$0xf]
    %v3193 = vld [vmem:[#allocation16] sm:$0x1]
    %v3195 = vlaneseq
    %v3196 = vshrl.u32 %v3195, 7
    %v3197 = vsub.s32 0, %v3196
    %v3198 = vrot.slane %v3193, %v3197
    %v3232 = vunpack.c.l.b16 %v3161
    %v3233 = vunpack.c.l.b16 %v3162
    %v3234 = vunpack.c.l.b16 %v3163
    %v3235 = vunpack.c.l.b16 %v3164
    %v3236 = vunpack.c.l.b16 %v3165
    %v3237 = vunpack.c.l.b16 %v3166
    %v3238 = vunpack.c.l.b16 %v3167
    %v3239 = vunpack.c.l.b16 %v3168
    %v3240 = vunpack.c.l.b16 %v3169
    %v3241 = vunpack.c.l.b16 %v3170
    %v3242 = vunpack.c.l.b16 %v3171
    %v3243 = vunpack.c.l.b16 %v3172
    %v3244 = vunpack.c.l.b16 %v3173
    %v3245 = vunpack.c.l.b16 %v3174
    %v3246 = vunpack.c.l.b16 %v3175
    %v3247 = vunpack.c.l.b16 %v3176
    %v3248 = vunpack.c.l.b16 %v3177
    %v3249 = vunpack.c.l.b16 %v3178
    %v3250 = vunpack.c.l.b16 %v3179
    %v3251 = vunpack.c.l.b16 %v3180
    %v3252 = vunpack.c.l.b16 %v3181
    %v3253 = vunpack.c.l.b16 %v3182
    %v3254 = vunpack.c.l.b16 %v3183
    %v3255 = vunpack.c.l.b16 %v3184
    %v3256 = vunpack.c.l.b16 %v3185
    %v3257 = vunpack.c.l.b16 %v3186
    %v3258 = vunpack.c.l.b16 %v3187
    %v3259 = vunpack.c.l.b16 %v3188
    %v3260 = vunpack.c.l.b16 %v3189
    %v3261 = vunpack.c.l.b16 %v3190
    %v3262 = vunpack.c.l.b16 %v3191
    %v3263 = vunpack.c.l.b16 %v3192
    %v3264 = vpack.c.b16 %v3233, %v3232
    %v3265 = vpack.c.b16 %v3235, %v3234
    %v3266 = vpack.c.b16 %v3237, %v3236
    %v3267 = vpack.c.b16 %v3239, %v3238
    %v3268 = vpack.c.b16 %v3241, %v3240
    %v3269 = vpack.c.b16 %v3243, %v3242
    %v3270 = vpack.c.b16 %v3245, %v3244
    %v3271 = vpack.c.b16 %v3247, %v3246
    %v3272 = vpack.c.b16 %v3249, %v3248
    %v3273 = vpack.c.b16 %v3251, %v3250
    %v3274 = vpack.c.b16 %v3253, %v3252
    %v3275 = vpack.c.b16 %v3255, %v3254
    %v3276 = vpack.c.b16 %v3257, %v3256
    %v3277 = vpack.c.b16 %v3259, %v3258
    %v3278 = vpack.c.b16 %v3261, %v3260
    %v3279 = vpack.c.b16 %v3263, %v3262
    %3296 = vmatprep.subr.bf16.mxu0 0
    %3297 = vmatpush1.bf16.msra.mxu0 %v3264
    %3298 = vmatprep.subr.bf16.mxu0 0
    %3299 = vmatpush1.bf16.msra.mxu0 %v3265
    %3300 = vmatprep.subr.bf16.mxu0 0
    %3301 = vmatpush1.bf16.msra.mxu0 %v3266
    %3302 = vmatprep.subr.bf16.mxu0 0
    %3303 = vmatpush1.bf16.msra.mxu0 %v3267
    %3304 = vmatprep.subr.bf16.mxu0 0
    %3305 = vmatpush1.bf16.msra.mxu0 %v3268
    %3306 = vmatprep.subr.bf16.mxu0 0
    %3307 = vmatpush1.bf16.msra.mxu0 %v3269
    %3308 = vmatprep.subr.bf16.mxu0 0
    %3309 = vmatpush1.bf16.msra.mxu0 %v3270
    %3310 = vmatprep.subr.bf16.mxu0 0
    %3311 = vmatpush1.bf16.msra.mxu0 %v3271
    %3312 = vmatprep.subr.bf16.mxu0 0
    %3313 = vmatpush1.bf16.msra.mxu0 %v3272
    %3314 = vmatprep.subr.bf16.mxu0 0
    %3315 = vmatpush1.bf16.msra.mxu0 %v3273
    %3316 = vmatprep.subr.bf16.mxu0 0
    %3317 = vmatpush1.bf16.msra.mxu0 %v3274
    %3318 = vmatprep.subr.bf16.mxu0 0
    %3319 = vmatpush1.bf16.msra.mxu0 %v3275
    %3320 = vmatprep.subr.bf16.mxu0 0
    %3321 = vmatpush1.bf16.msra.mxu0 %v3276
    %3322 = vmatprep.subr.bf16.mxu0 0
    %3323 = vmatpush1.bf16.msra.mxu0 %v3277
    %3324 = vmatprep.subr.bf16.mxu0 0
    %3325 = vmatpush1.bf16.msra.mxu0 %v3278
    %3326 = vmatprep.subr.bf16.mxu0 0
    %3327 = vmatpush1.bf16.msra.mxu0 %v3279
    %3328 = vmatprep.mubr.bf16.mxu0 %v3160
    %3329 = vmatmul.mubr.bf16.gmra.mrb[0].mxu0 %v3159
    %v3330 = vpop.f32.mrb[0].mxu0
    %v3331 = vadd.f32 %v3198, %v3330
    %v3332 = vpop.f32.mrb[0].mxu0
    %v3333 = vpop.f32.mrb[0].mxu0
    %v3334 = vpop.f32.mrb[0].mxu0
    %3335 = vdwg.mxu0
    %v3336 = vmax.f32 %v3331, 0.0
    %v3337 = vpack.c.bf16 %v3336, %v3336
    %v3338 = vld [vmem:[#allocation17] sm:$0xf]
    %v3339 = vld [vmem:[#allocation17 + $0x4] sm:$0xf]
    %v3340 = vld [vmem:[#allocation17 + $0x8] sm:$0xf]
    %v3341 = vld [vmem:[#allocation17 + $0xc] sm:$0xf]
    %v3342 = vld [vmem:[#allocation17 + $0x10] sm:$0xf]
    %v3343 = vld [vmem:[#allocation17 + $0x14] sm:$0xf]
    %v3344 = vld [vmem:[#allocation17 + $0x18] sm:$0xf]
    %v3345 = vld [vmem:[#allocation17 + $0x1c] sm:$0xf]
    %v3346 = vld [vmem:[#allocation17 + $0x20] sm:$0xf]
    %v3347 = vld [vmem:[#allocation17 + $0x24] sm:$0xf]
    %v3348 = vld [vmem:[#allocation17 + $0x28] sm:$0xf]
    %v3349 = vld [vmem:[#allocation17 + $0x2c] sm:$0xf]
    %v3350 = vld [vmem:[#allocation17 + $0x30] sm:$0xf]
    %v3351 = vld [vmem:[#allocation17 + $0x34] sm:$0xf]
    %v3352 = vld [vmem:[#allocation17 + $0x38] sm:$0xf]
    %v3353 = vld [vmem:[#allocation17 + $0x3c] sm:$0xf]
    %v3354 = vld [vmem:[#allocation19] sm:$0x1]
    %v3356 = vlaneseq
    %v3357 = vshrl.u32 %v3356, 7
    %v3358 = vsub.s32 0, %v3357
    %v3359 = vrot.slane %v3354, %v3358
    %v3377 = vunpack.c.l.b16 %v3338
    %v3378 = vunpack.c.l.b16 %v3339
    %v3379 = vunpack.c.l.b16 %v3340
    %v3380 = vunpack.c.l.b16 %v3341
    %v3381 = vunpack.c.l.b16 %v3342
    %v3382 = vunpack.c.l.b16 %v3343
    %v3383 = vunpack.c.l.b16 %v3344
    %v3384 = vunpack.c.l.b16 %v3345
    %v3385 = vunpack.c.l.b16 %v3346
    %v3386 = vunpack.c.l.b16 %v3347
    %v3387 = vunpack.c.l.b16 %v3348
    %v3388 = vunpack.c.l.b16 %v3349
    %v3389 = vunpack.c.l.b16 %v3350
    %v3390 = vunpack.c.l.b16 %v3351
    %v3391 = vunpack.c.l.b16 %v3352
    %v3392 = vunpack.c.l.b16 %v3353
    %v3393 = vpack.c.b16 %v3378, %v3377
    %v3394 = vpack.c.b16 %v3380, %v3379
    %v3395 = vpack.c.b16 %v3382, %v3381
    %v3396 = vpack.c.b16 %v3384, %v3383
    %v3397 = vpack.c.b16 %v3386, %v3385
    %v3398 = vpack.c.b16 %v3388, %v3387
    %v3399 = vpack.c.b16 %v3390, %v3389
    %v3400 = vpack.c.b16 %v3392, %v3391
    %3409 = vmatprep.subr.bf16.mxu0 0
    %3410 = vmatpush1.bf16.msra.mxu0 %v3393
    %3411 = vmatprep.subr.bf16.mxu0 0
    %3412 = vmatpush1.bf16.msra.mxu0 %v3394
    %3413 = vmatprep.subr.bf16.mxu0 0
    %3414 = vmatpush1.bf16.msra.mxu0 %v3395
    %3415 = vmatprep.subr.bf16.mxu0 0
    %3416 = vmatpush1.bf16.msra.mxu0 %v3396
    %3417 = vmatprep.subr.bf16.mxu0 0
    %3418 = vmatpush1.bf16.msra.mxu0 %v3397
    %3419 = vmatprep.subr.bf16.mxu0 0
    %3420 = vmatpush1.bf16.msra.mxu0 %v3398
    %3421 = vmatprep.subr.bf16.mxu0 0
    %3422 = vmatpush1.bf16.msra.mxu0 %v3399
    %3423 = vmatprep.subr.bf16.mxu0 0
    %3424 = vmatpush1.bf16.msra.mxu0 %v3400
    %3425 = vmatprep.subr.bf16.mxu0 0
    %3426 = vmatpush1.bf16.msra.mxu0 0
    %3427 = vmatprep.subr.bf16.mxu0 0
    %3428 = vmatpush1.bf16.msra.mxu0 0
    %3429 = vmatprep.subr.bf16.mxu0 0
    %3430 = vmatpush1.bf16.msra.mxu0 0
    %3431 = vmatprep.subr.bf16.mxu0 0
    %3432 = vmatpush1.bf16.msra.mxu0 0
    %3433 = vmatprep.subr.bf16.mxu0 0
    %3434 = vmatpush1.bf16.msra.mxu0 0
    %3435 = vmatprep.subr.bf16.mxu0 0
    %3436 = vmatpush1.bf16.msra.mxu0 0
    %3437 = vmatprep.subr.bf16.mxu0 0
    %3438 = vmatpush1.bf16.msra.mxu0 0
    %3439 = vmatprep.subr.bf16.mxu0 0
    %3440 = vmatpush1.bf16.msra.mxu0 0
    %3441 = vmatprep.mubr.bf16.mxu0 0
    %3442 = vmatmul.mubr.bf16.gmra.mrb[0].mxu0 %v3337
    %v3443 = vpop.f32.mrb[0].mxu0
    %v3444 = vadd.f32 %v3359, %v3443
    %v3445 = vpop.f32.mrb[0].mxu0
    %v3446 = vpop.f32.mrb[0].mxu0
    %v3447 = vpop.f32.mrb[0].mxu0
    %3448 = vdwg.mxu0
    %v3449 = vlaneseq
    %v3450 = vand.u32 %v3449, 127
    %vm3451 = vcmp.lt.s32.totalorder %v3450, 6
    %v3452 = vsel %vm3451, %v3444, -1e+30
    %3453 = vmax.xlane.f32.xlu0 %v3452
    %v3454 = vpop.xlane.xlu0 %3453
    %v3455 = vsub.f32 %v3452, %v3454
    %v3456 = vmul.f32 %v3455, 1.442695
    %v3457 = vpow.pop %v3456
    %v3458 = vsel %vm3451, %v3457, 0.0
    %3459 = vadd.xlane.f32.xlu0 %v3458
    %v3460 = vpop.xlane.xlu0 %3459
    %v3461 = vrcp.pop %v3460
    %v3462 = vmul.f32 %v3458, %v3461
    %3463 = vst [vmem:[#allocation20] sm:$0xff] %v3462
    // Predicated region
    $region90: #{cnn_forward.1} parent=1 // pred_check
      _
    $region91: #{cnn_forward.1} parent=1 // pred_check_branch
      %3465 = sbr.rel (0) target = $region93
    $region92: #{cnn_forward.1} parent=1 // pred_region
      %s3467 = ssub.s32 128, 128
      %3468 = vsyncadd [#allocation4], %s3467
      %s3470 = sshll.u32 [#allocation20], 4
      %s3471 = int_to_ptr.vmem [resolvable:$true] %s3470
      %3473 = dma.vmem_to_hbm [thread:$0]  %s3471, 128, %s11, [#allocation4]
    $region93: #{cnn_forward.1} parent=1 // pred_fallthru
      _
    // Predicated region
    $region94: #{cnn_forward.1} parent=1 // pred_check
      _
    $region95: #{cnn_forward.1} parent=1 // pred_check_branch
      %3475 = sbr.rel (0) target = $region97
    $region96: #{cnn_forward.1} parent=1 // pred_region
      %3476 = dma.done [#allocation4], 128
    $region97: #{cnn_forward.1} parent=1 // pred_fallthru
      _
    %3477 = vsyncpa [#allocation3], 1
    %3478 = vsyncpa [#allocation6], 1
    %3479 = vsyncpa [#allocation9], 1
    %3480 = vsyncpa [#allocation12], 1
    %3481 = vsyncpa [#allocation15], 1
    %3482 = vsyncpa [#allocation18], 1
    %3483 = vsyncpa [#allocation4], 1

</llo_original>
